<compile_context>
chip_gen: v5e
topology: v5e:2x2
jax: 0.10.0
libtpu: 0.0.40
codegen_flags: <defaults>
</compile_context>

<pallas_src>
import functools

import jax
import jax.numpy as jnp
from jax import lax
from jax.experimental import pallas as pl
from jax.experimental.pallas import tpu as pltpu


# ----------------------------------------------------------------------------
# Kernels
# ----------------------------------------------------------------------------
def _direct_acc_kernel(x1_ref, x2_ref, out_ref, acc_ref, *, precision):
    # x1_ref: (1, TS, D), x2_ref: (1, TM, D), out_ref: (1, TM, D), acc: (TM, D) f32
    s_idx = pl.program_id(2)

    @pl.when(s_idx == 0)
    def _init():
        acc_ref[...] = jnp.zeros_like(acc_ref)

    x1_t = x1_ref[0]  # (TS, D)
    x2_t = x2_ref[0]  # (TM, D)
    # P = x2_tile @ x1_tile^T -> (TM, TS); contract on D, no explicit transpose.
    p = lax.dot_general(
        x2_t, x1_t,
        dimension_numbers=(((1,), (1,)), ((), ())),
        preferred_element_type=jnp.float32,
        precision=precision,
    )
    # acc += P @ x1_tile -> (TM, D); partial sum over this S tile.
    acc_ref[...] += jnp.dot(
        p.astype(x1_t.dtype), x1_t,
        preferred_element_type=jnp.float32, precision=precision,
    )

    @pl.when(s_idx == pl.num_programs(2) - 1)
    def _writeback():
        out_ref[0] = acc_ref[...].astype(out_ref.dtype)


def _direct_nosplit_kernel(x1_ref, x2_ref, out_ref, *, precision):
    # x1_ref: (1, S, D) (resident, fetched once per batch), x2_ref/out_ref: (1, TM, D).
    x1_t = x1_ref[0]  # (S, D)
    x2_t = x2_ref[0]  # (TM, D)
    p = lax.dot_general(
        x2_t, x1_t,
        dimension_numbers=(((1,), (1,)), ((), ())),
        preferred_element_type=jnp.float32,
        precision=precision,
    )
    out_ref[0] = jnp.dot(
        p.astype(x1_t.dtype), x1_t,
        preferred_element_type=jnp.float32, precision=precision,
    ).astype(out_ref.dtype)


def _gram_kernel(x1_ref, g_ref, acc_ref, *, precision):
    # x1_ref: (1, TS, D); g_ref: (1, D, D) f32; acc: (D, D) f32.
    s_idx = pl.program_id(1)

    @pl.when(s_idx == 0)
    def _init():
        acc_ref[...] = jnp.zeros_like(acc_ref)

    x1_t = x1_ref[0]  # (TS, D)
    # G += x1_tile^T @ x1_tile -> (D, D); contract on the S tile.
    acc_ref[...] += lax.dot_general(
        x1_t, x1_t,
        dimension_numbers=(((0,), (0,)), ((), ())),
        preferred_element_type=jnp.float32,
        precision=precision,
    )

    @pl.when(s_idx == pl.num_programs(1) - 1)
    def _writeback():
        g_ref[0] = acc_ref[...]


def _apply_gram_kernel(x2_ref, g_ref, out_ref, *, precision, compute_dtype):
    # x2_ref: (1, TM, D), g_ref: (1, D, D) f32, out_ref: (1, TM, D).
    x2_t = x2_ref[0]
    g = g_ref[0].astype(compute_dtype)
    out_ref[0] = jnp.dot(
        x2_t, g, preferred_element_type=jnp.float32, precision=precision,
    ).astype(out_ref.dtype)


# ----------------------------------------------------------------------------
# Planning helpers
# ----------------------------------------------------------------------------
def _largest_divisor_tile(dim: int, target: int) -> int:
    """Largest multiple-of-8 divisor of `dim` that is <= target; else `dim` itself
    (a block equal to the full array dim is always legal)."""
    if dim <= target:
        return dim
    t = (target // 8) * 8
    while t >= 8:
        if dim % t == 0:
            return t
        t -= 8
    return dim


def _tpu_defaults():
    """(vmem_budget_bytes, tm_target, ts_target) derived from the local TPU."""
    kind = ""
    try:
        kind = jax.devices()[0].device_kind.lower()
    except Exception:
        pass
    budget = 48 * 1024 * 1024  # conservative default (safe on v7x's 64 MiB/TC)
    try:
        info = pltpu.get_tpu_info()
        cap = int(getattr(info, "vmem_capacity_bytes", 64 * 1024 * 1024))
        budget = max(int(cap * 3 // 4), 16 * 1024 * 1024)
    except Exception:
        if any(k in kind for k in ("v4", "v5", "v6")):
            budget = 96 * 1024 * 1024  # 128 MiB parts
    tm_target = 512 if budget >= 80 * 1024 * 1024 else 256
    ts_target = 128 if ("v5e" in kind or "v5 lite" in kind) else 256
    return budget, tm_target, ts_target


def _vmem_limit(needed: int, budget: int) -> int:
    return int(max(needed, min(budget, max(2 * needed, 32 * 1024 * 1024))))


def _plan_direct(B, M, S, D, in_b, out_b, budget, tm_target, ts_target):
    # Keep >=2 parallel tiles when possible so both TensorCores (v7x) get work.
    if B == 1 and M > 8:
        tm_target = min(tm_target, max(8, M // 2))
    tm = _largest_divisor_tile(M, tm_target)

    def nosplit_bytes(t):
        # 2x-buffered x1(S,D) + x2(t,D) inputs, 2x-buffered out(t,D), p(t,S) f32.
        return 2 * (S + t) * D * in_b + 2 * t * D * out_b + t * S * 4

    def split_bytes(t, u):
        return 2 * (u + t) * D * in_b + 2 * t * D * out_b + t * D * 4 + t * u * 4

    # Prefer the S-resident form: x1 DMA'd once per batch, no f32 accumulator.
    t = tm
    while True:
        if nosplit_bytes(t) <= budget:
            return t, S, False
        nxt = _largest_divisor_tile(M, max(8, t // 2))
        if nxt == t:
            break
        t = nxt

    # Fall back to the S-tiled accumulator form.
    ts = _largest_divisor_tile(S, ts_target)
    t = tm
    for _ in range(64):
        if split_bytes(t, ts) <= budget:
            break
        cand_t = _largest_divisor_tile(M, max(8, t // 2))
        cand_ts = _largest_divisor_tile(S, max(8, ts // 2))
        if ts >= t and cand_ts < ts:
            ts = cand_ts
        elif cand_t < t:
            t = cand_t
        elif cand_ts < ts:
            ts = cand_ts
        else:
            break
    return t, ts, True


def _plan_gram(B, M, S, D, in_b, out_b, budget, tm_target, ts_target):
    # Stage 1: 2x-buffered x1(TS,D) + 2x-buffered G(D,D) f32 out + (D,D) f32 acc.
    def k1_bytes(u):
        return 2 * u * D * in_b + 3 * D * D * 4

    ts = S if k1_bytes(S) <= budget else _largest_divisor_tile(S, ts_target)
    for _ in range(64):
        if k1_bytes(ts) <= budget:
            break
        nxt = _largest_divisor_tile(S, max(8, ts // 2))
        if nxt == ts:
            break
        ts = nxt

    if B == 1 and M > 8:
        tm_target = min(tm_target, max(8, M // 2))

    # Stage 2: 2x-buffered x2(TM,D) + out(TM,D) + 2x-buffered G(D,D) f32.
    def k2_bytes(t):
        return 2 * t * D * (in_b + out_b) + 2 * D * D * 4

    tm = _largest_divisor_tile(M, tm_target)
    for _ in range(64):
        if k2_bytes(tm) <= budget:
            break
        nxt = _largest_divisor_tile(M, max(8, tm // 2))
        if nxt == tm:
            break
        tm = nxt
    return tm, ts


# ----------------------------------------------------------------------------
# Forward paths
# ----------------------------------------------------------------------------
def _direct_forward(x1, x2, out_dtype, prec, budget, tm_target, ts_target, ts_override):
    B, S, D = x1.shape
    _, M, _ = x2.shape
    in_b = jnp.dtype(x1.dtype).itemsize
    out_b = jnp.dtype(out_dtype).itemsize

    tm, ts, split = _plan_direct(B, M, S, D, in_b, out_b, budget, tm_target, ts_target)
    if ts_override is not None and ts_override < S:
        assert S % ts_override == 0, "ts_override must divide S"
        ts, split = ts_override, True

    if not split:
        needed = 2 * (S + tm) * D * in_b + 2 * tm * D * out_b + tm * S * 4
        cost = pl.CostEstimate(
            flops=int(4 * B * M * S * D), transcendentals=0,
            bytes_accessed=int(in_b * B * D * (S + M) + out_b * B * M * D))
        return pl.pallas_call(
            functools.partial(_direct_nosplit_kernel, precision=prec),
            out_shape=jax.ShapeDtypeStruct((B, M, D), out_dtype),
            grid_spec=pltpu.PrefetchScalarGridSpec(
                num_scalar_prefetch=0,
                grid=(B, M // tm),
                in_specs=[
                    pl.BlockSpec((1, S, D), lambda b, m: (b, 0, 0)),   # x1: once/batch
                    pl.BlockSpec((1, tm, D), lambda b, m: (b, m, 0)),  # x2
                ],
                out_specs=pl.BlockSpec((1, tm, D), lambda b, m: (b, m, 0)),
            ),
            compiler_params=pltpu.CompilerParams(
                dimension_semantics=("parallel", "parallel"),
                vmem_limit_bytes=_vmem_limit(needed, budget)),
            cost_estimate=cost,
        )(x1, x2)

    needed = 2 * (ts + tm) * D * in_b + 2 * tm * D * out_b + tm * D * 4 + tm * ts * 4
    cost = pl.CostEstimate(
        flops=int(4 * B * M * S * D), transcendentals=0,
        bytes_accessed=int(in_b * B * D * (S * (M // tm) + M) + out_b * B * M * D))
    return pl.pallas_call(
        functools.partial(_direct_acc_kernel, precision=prec),
        out_shape=jax.ShapeDtypeStruct((B, M, D), out_dtype),
        grid_spec=pltpu.PrefetchScalarGridSpec(
            num_scalar_prefetch=0,
            grid=(B, M // tm, S // ts),
            in_specs=[
                pl.BlockSpec((1, ts, D), lambda b, m, s: (b, s, 0)),   # x1 (ignores m)
                pl.BlockSpec((1, tm, D), lambda b, m, s: (b, m, 0)),   # x2 (ignores s)
            ],
            out_specs=pl.BlockSpec((1, tm, D), lambda b, m, s: (b, m, 0)),
            scratch_shapes=[pltpu.VMEM((tm, D), jnp.float32)],
        ),
        compiler_params=pltpu.CompilerParams(
            dimension_semantics=("parallel", "parallel", "arbitrary"),
            vmem_limit_bytes=_vmem_limit(needed, budget)),
        cost_estimate=cost,
    )(x1, x2)


def _gram_forward(x1, x2, compute_dtype, out_dtype, prec, budget, tm_target, ts_target):
    B, S, D = x1.shape
    _, M, _ = x2.shape
    in_b = jnp.dtype(compute_dtype).itemsize
    out_b = jnp.dtype(out_dtype).itemsize
    tm, ts = _plan_gram(B, M, S, D, in_b, out_b, budget, tm_target, ts_target)

    # Stage 1: G[b] = x1[b]^T @ x1[b]  (DxD, f32), accumulated over S tiles.
    k1_needed = 2 * ts * D * in_b + 3 * D * D * 4
    g = pl.pallas_call(
        functools.partial(_gram_kernel, precision=prec),
        out_shape=jax.ShapeDtypeStruct((B, D, D), jnp.float32),
        grid_spec=pltpu.PrefetchScalarGridSpec(
            num_scalar_prefetch=0,
            grid=(B, S // ts),
            in_specs=[pl.BlockSpec((1, ts, D), lambda b, s: (b, s, 0))],
            out_specs=pl.BlockSpec((1, D, D), lambda b, s: (b, 0, 0)),
            scratch_shapes=[pltpu.VMEM((D, D), jnp.float32)],
        ),
        compiler_params=pltpu.CompilerParams(
            dimension_semantics=("parallel", "arbitrary"),
            vmem_limit_bytes=_vmem_limit(k1_needed, budget)),
        cost_estimate=pl.CostEstimate(
            flops=int(2 * B * S * D * D), transcendentals=0,
            bytes_accessed=int(in_b * B * S * D + 4 * B * D * D)),
    )(x1)

    # Stage 2: out[b] = x2[b] @ G[b].
    k2_needed = 2 * tm * D * (in_b + out_b) + 2 * D * D * 4
    return pl.pallas_call(
        functools.partial(_apply_gram_kernel, precision=prec, compute_dtype=compute_dtype),
        out_shape=jax.ShapeDtypeStruct((B, M, D), out_dtype),
        grid_spec=pltpu.PrefetchScalarGridSpec(
            num_scalar_prefetch=0,
            grid=(B, M // tm),
            in_specs=[
                pl.BlockSpec((1, tm, D), lambda b, m: (b, m, 0)),
                pl.BlockSpec((1, D, D), lambda b, m: (b, 0, 0)),  # G: once/batch
            ],
            out_specs=pl.BlockSpec((1, tm, D), lambda b, m: (b, m, 0)),
        ),
        compiler_params=pltpu.CompilerParams(
            dimension_semantics=("parallel", "parallel"),
            vmem_limit_bytes=_vmem_limit(k2_needed, budget)),
        cost_estimate=pl.CostEstimate(
            flops=int(2 * B * M * D * D), transcendentals=0,
            bytes_accessed=int(in_b * B * M * D + 4 * B * D * D + out_b * B * M * D)),
    )(x2, g)


def model_forward(x1, x2, *, force_gram=None, ts_override=None):
    B, S, D = x1.shape
    B2, M, D2 = x2.shape
    assert B == B2 and D == D2, "x1/x2 batch or inner dims mismatch"

    compute_dtype = jnp.promote_types(x1.dtype, x2.dtype)
    x1 = x1.astype(compute_dtype)
    x2 = x2.astype(compute_dtype)
    out_dtype = compute_dtype
    # Match the reference's Precision.HIGHEST for f32; MXU-rate default for sub-f32.
    prec = lax.Precision.HIGHEST if compute_dtype == jnp.float32 else lax.Precision.DEFAULT

    budget, tm_target, ts_target = _tpu_defaults()

    # Gram form is cheaper when 2*D*(M+S) < 4*M*S  (i.e. D << M, S).
    use_gram = (D * (M + S) < 2 * M * S) if force_gram is None else bool(force_gram)
    if use_gram:
        return _gram_forward(x1, x2, compute_dtype, out_dtype, prec, budget,
                             tm_target, ts_target)
    return _direct_forward(x1, x2, out_dtype, prec, budget, tm_target, ts_target,
                           ts_override)


def model_reference(x1, x2):
    v0 = jnp.swapaxes(x1, 1, 2)                                   # x1^T
    v4 = jnp.matmul(x2, v0, precision=lax.Precision.HIGHEST)      # bmm(x2, x1^T)
    return jnp.matmul(v4, x1, precision=lax.Precision.HIGHEST)    # matmul(v4, x1)


if __name__ == "__main__":
    key = jax.random.PRNGKey(0)
    k1, k2, k3, k4, k5, k6, k7, k8 = jax.random.split(key, 8)

    # Case 1: Gram path (D << M,S), B=2, S=M=256, D=128.
    x1 = jax.random.normal(k1, (2, 256, 128), dtype=jnp.float32)
    x2 = jax.random.normal(k2, (2, 256, 128), dtype=jnp.float32)
    out = jax.block_until_ready(model_forward(x1, x2))
    ref = model_reference(x1, x2)
    assert out.shape == ref.shape
    assert jnp.allclose(out, ref, atol=1e-3, rtol=1e-3), "mismatch (gram case)"

    # Case 2: same shapes, forced direct path with S-tiled accumulator (TS=128).
    out2 = jax.block_until_ready(model_forward(x1, x2, force_gram=False, ts_override=128))
    assert jnp.allclose(out2, ref, atol=1e-3, rtol=1e-3), "mismatch (direct split case)"

    # Case 3: direct path (D large relative to M,S), S-resident / no-accumulator kernel.
    x1c = jax.random.normal(k3, (1, 64, 256), dtype=jnp.float32)
    x2c = jax.random.normal(k4, (1, 128, 256), dtype=jnp.float32)
    out3 = jax.block_until_ready(model_forward(x1c, x2c))
    ref3 = model_reference(x1c, x2c)
    assert jnp.allclose(out3, ref3, atol=1e-3, rtol=1e-3), "mismatch (direct nosplit case)"

    # Case 4: the original module's tiny shapes (1, 2, 2); tiles fall back to full dims.
    x1s = jax.random.normal(k5, (1, 2, 2), dtype=jnp.float32)
    x2s = jax.random.normal(k6, (1, 2, 2), dtype=jnp.float32)
    out4 = jax.block_until_ready(model_forward(x1s, x2s))
    ref4 = model_reference(x1s, x2s)
    assert out4.shape == (1, 2, 2)
    assert jnp.allclose(out4, ref4, atol=1e-4, rtol=1e-4), "mismatch (tiny case)"

    # Case 5: mixed input dtypes (f32 x1, bf16 x2) -> pre-cast to promoted dtype.
    x1m = jax.random.normal(k7, (1, 16, 8), dtype=jnp.float32)
    x2m = jax.random.normal(k8, (1, 16, 8), dtype=jnp.bfloat16)
    out5 = jax.block_until_ready(model_forward(x1m, x2m))
    ref5 = model_reference(x1m, x2m)
    assert out5.dtype == ref5.dtype
    assert jnp.allclose(out5, ref5, atol=2e-3, rtol=2e-3), "mismatch (mixed dtype case)"

    print("KERNEL_OK")
</pallas_src>

<mosaic_0001>
module attributes {stable_mosaic.version = 11 : i64} {
  func.func @_gram_kernel(%arg0: i32, %arg1: i32, %arg2: memref<1x256x128xf32, #tpu.memory_space<vmem>>, %arg3: memref<1x128x128xf32, #tpu.memory_space<vmem>>, %arg4: memref<128x128xf32, #tpu.memory_space<vmem>>) attributes {dimension_semantics = [#tpu.dimension_semantics<parallel>, #tpu.dimension_semantics<arbitrary>], iteration_bounds = array<i64: 2, 1>, scalar_prefetch = 0 : i64, scratch_operands = 1 : i64, tpu.core_type = #tpu.core_type<tc>, window_params = [{transform_indices = @transform_0, window_bounds = array<i64: 1, 256, 128>}, {transform_indices = @transform_1, window_bounds = array<i64: 1, 128, 128>}]} {
    %c0_i32 = arith.constant 0 : i32
    %0 = arith.cmpi eq, %arg1, %c0_i32 : i32
    %1 = arith.extui %0 : i1 to i32
    %c0_i32_0 = arith.constant 0 : i32
    %2 = arith.cmpi ne, %1, %c0_i32_0 : i32
    scf.if %2 {
      %cst_9 = arith.constant 0.000000e+00 : f32
      %12 = vector.broadcast %cst_9 : f32 to vector<128x128xf32>
      %c0_10 = arith.constant 0 : index
      %c0_11 = arith.constant 0 : index
      %13 = vector.load %arg4[%c0_10, %c0_11] : memref<128x128xf32, #tpu.memory_space<vmem>>, vector<128x128xf32>
      tpu.vector_store %arg4[%c0_10, %c0_11], %12 {strides = array<i32>} : memref<128x128xf32, #tpu.memory_space<vmem>>, vector<128x128xf32>,
    } else {
    }
    %c0 = arith.constant 0 : index
    %c0_1 = arith.constant 0 : index
    %c0_2 = arith.constant 0 : index
    %3 = vector.load %arg2[%c0, %c0_1, %c0_2] : memref<1x256x128xf32, #tpu.memory_space<vmem>>, vector<1x256x128xf32>
    %4 = vector.shape_cast %3 : vector<1x256x128xf32> to vector<256x128xf32>
    %c0_3 = arith.constant 0 : index
    %c0_4 = arith.constant 0 : index
    %5 = vector.load %arg4[%c0_3, %c0_4] : memref<128x128xf32, #tpu.memory_space<vmem>>, vector<128x128xf32>
    %cst = arith.constant dense<0.000000e+00> : vector<128x128xf32>
    %6 = tpu.matmul %4, %4, %cst {dimension_numbers = #tpu.dot_dimension_numbers<[0], [0], [1], [1], [0, 1, 1, 1], [], []>, precision = #tpu.contract_precision<fp32>} : vector<256x128xf32>, vector<256x128xf32>, vector<128x128xf32> -> vector<128x128xf32>
    %7 = arith.addf %5, %6 : vector<128x128xf32>
    %c0_5 = arith.constant 0 : index
    %c0_6 = arith.constant 0 : index
    %8 = vector.load %arg4[%c0_5, %c0_6] : memref<128x128xf32, #tpu.memory_space<vmem>>, vector<128x128xf32>
    tpu.vector_store %arg4[%c0_5, %c0_6], %7 {strides = array<i32>} : memref<128x128xf32, #tpu.memory_space<vmem>>, vector<128x128xf32>,
    %c0_i32_7 = arith.constant 0 : i32
    %9 = arith.cmpi eq, %arg1, %c0_i32_7 : i32
    %10 = arith.extui %9 : i1 to i32
    %c0_i32_8 = arith.constant 0 : i32
    %11 = arith.cmpi ne, %10, %c0_i32_8 : i32
    scf.if %11 {
      %c0_9 = arith.constant 0 : index
      %c0_10 = arith.constant 0 : index
      %12 = vector.load %arg4[%c0_9, %c0_10] : memref<128x128xf32, #tpu.memory_space<vmem>>, vector<128x128xf32>
      %c0_11 = arith.constant 0 : index
      %c0_12 = arith.constant 0 : index
      %c0_13 = arith.constant 0 : index
      %13 = vector.load %arg3[%c0_11, %c0_12, %c0_13] : memref<1x128x128xf32, #tpu.memory_space<vmem>>, vector<1x128x128xf32>
      %14 = vector.shape_cast %13 : vector<1x128x128xf32> to vector<128x128xf32>
      %15 = vector.shape_cast %12 : vector<128x128xf32> to vector<1x128x128xf32>
      tpu.vector_store %arg3[%c0_11, %c0_12, %c0_13], %15 {strides = array<i32>} : memref<1x128x128xf32, #tpu.memory_space<vmem>>, vector<1x128x128xf32>,
    } else {
    }
    return
  }
  func.func @transform_0(%arg0: i32, %arg1: i32) -> (i32, i32, i32) {
    %c0_i32 = arith.constant 0 : i32
    %c0_i32_0 = arith.constant 0 : i32
    return %arg0, %arg1, %c0_i32 : i32, i32, i32
  }
  func.func @transform_1(%arg0: i32, %arg1: i32) -> (i32, i32, i32) {
    %c0_i32 = arith.constant 0 : i32
    %c0_i32_0 = arith.constant 0 : i32
    %c0_i32_1 = arith.constant 0 : i32
    return %arg0, %c0_i32, %c0_i32_0 : i32, i32, i32
  }
}

</mosaic_0001>

<llo_original>
// kernel: tpu_custom_call.1
$region0: #{tpu_custom_call.1}
  #allocation0 [shape = 'u32[]', space=smem, size = 0x4, offset = 0x4, fixed_abs, tag = 'smem constant byte address 0x4 - core index']
  #allocation1 [shape = 'u32[72,128]{1,0:T(1,128)}', space=vmem, size = 0x9000, scoped, tag = 'internal scratch']
  #allocation2 [shape = 'f32[128,128]{1,0:T(8,128)}', space=vmem, size = 0x10000, scoped, tag = 'scratch operand']
  %s0 = inlined_call_operand.hbm [shape: f32[2,256,128], index: 0, kind: input, shape index: {}]
  %s1 = inlined_call_operand.hbm [shape: f32[2,128,128], index: 1, kind: output, shape index: {}]
  %s2 = sld [smem:[#allocation0]]
  $region49: #{tpu_custom_call.1} parent=0
    _
  %s4 = ssub.s32 1, %s2
  %s5 = scalar_select 0, %s4, %s2
  $region1: #{tpu_custom_call.1} parent=0
    #allocation3 [shape = 'u8[262144]{0}', space=vmem, size = 0x40000, scoped, tag = 'input window, operand 0']
    #allocation4 [shape = 's32[2]{0}', space=sflag, size = 0x8, scoped, tag = 'scoped memory for tpu_custom_call.1']
    #allocation5 [shape = 's32[2]{0}', space=sflag, size = 0x8, scoped, tag = 'scoped memory for tpu_custom_call.1']
    #allocation6 [shape = 'u8[131072]{0}', space=vmem, size = 0x20000, scoped, tag = 'output window, operand 0']
    %6 = vsyncpa [#allocation4], 0
    %s7 = scalar_lea.sflag [#allocation4], 1
    %8 = vsyncpa %s7, 0
    %9 = vsyncpa [#allocation5], 0
    %s10 = scalar_lea.sflag [#allocation5], 1
    %11 = vsyncpa %s10, 0
    loop: start=0, step=1, limit=4
    $region2: #{tpu_custom_call.1} parent=1 // loop_pre_header
      _
    $region3: #{tpu_custom_call.1} parent=1 // loop_header
      %s13 = sphi 0, %s17
      %p14 = scmp.ge.s32.totalorder %s13, 4
      %s20 = sphi 0, %s32
      %s21 = sphi 0, %s28
      %s22 = sphi 0, %s20
      %s23 = sphi 0, %s21
      %s24 = sphi 0, %s22
      %s25 = sphi 0, %s23
      %s37 = sphi 0, %s39
      %s40 = sphi 0, %s37
      %s41 = sphi 0, %s40
      %s57 = sphi 0, %s41
      %s63 = sphi 0, %s65
      %s66 = sphi 0, %s63
      %s67 = sphi 0, %s66
      %s83 = sphi 0, %s67
    $region4: #{tpu_custom_call.1} parent=1 // loop_header_branch
      %16 = sbr.rel (%p14) target = $region8
    $region5: #{tpu_custom_call.1} parent=1 // loop_body
      %s18 = ssub.s32 %s13, 1
      %s19 = ssub.s32 %s13, 2
      %s26 = sadd.s32 1, %s21
      %p27 = scmp.ge.s32.totalorder %s26, 1
      %s28 = scalar_select %p27, 0, %s26
      %s29 = sadd.s32 1, %s20
      %s30 = scalar_select %p27, %s29, %s20
      %p31 = scmp.ge.s32.totalorder %s30, 2
      %s32 = scalar_select %p31, 0, %s30
      %s33 = ssub.s32 %s20, %s32
      %s34 = ssub.s32 %s21, %s28
      %s35 = sor.u32 %s33, %s34
      %p36 = scmp.eq.s32.totalorder %s35, 0
      %s38 = sadd.s32 %s37, 1
      %s39 = scalar_select %p36, %s37, %s38
      %p42 = pneg %p36
      %p43 = scmp.eq.s32.totalorder %s13, 1
      %p44 = por %p42, %p43
      %p45 = scmp.ne.s32.totalorder %s37, %s40
      %p46 = scmp.eq.s32.totalorder %s13, 0
      %p47 = por %p45, %p46
      %p48 = scmp.ne.s32.totalorder %s37, %s40
      %p49 = scmp.eq.s32.totalorder %s18, 1
      %p50 = por %p48, %p49
      %p51 = scmp.ne.s32.totalorder %s40, %s41
      %p52 = scmp.eq.s32.totalorder %s18, 0
      %p53 = por %p51, %p52
      %p54 = scmp.ne.s32.totalorder %s40, %s41
      %p55 = scmp.eq.s32.totalorder %s19, 1
      %p56 = por %p54, %p55
      %p58 = scmp.ne.s32.totalorder %s41, %s57
      %p59 = scmp.eq.s32.totalorder %s19, 0
      %p60 = por %p58, %p59
      %s61 = ssub.s32 %s20, %s32
      %p62 = scmp.eq.s32.totalorder %s61, 0
      %s64 = sadd.s32 %s63, 1
      %s65 = scalar_select %p62, %s63, %s64
      %p68 = pneg %p62
      %p69 = scmp.eq.s32.totalorder %s13, 1
      %p70 = por %p68, %p69
      %p71 = scmp.ne.s32.totalorder %s63, %s66
      %p72 = scmp.eq.s32.totalorder %s13, 0
      %p73 = por %p71, %p72
      %p74 = scmp.ne.s32.totalorder %s63, %s66
      %p75 = scmp.eq.s32.totalorder %s18, 1
      %p76 = por %p74, %p75
      %p77 = scmp.ne.s32.totalorder %s66, %s67
      %p78 = scmp.eq.s32.totalorder %s18, 0
      %p79 = por %p77, %p78
      %p80 = scmp.ne.s32.totalorder %s66, %s67
      %p81 = scmp.eq.s32.totalorder %s19, 1
      %p82 = por %p80, %p81
      %p84 = scmp.ne.s32.totalorder %s67, %s83
      %p85 = scmp.eq.s32.totalorder %s19, 0
      %p86 = por %p84, %p85
      %p87 = scmp.le.s32.totalorder 1, %s13
      %p88 = scmp.lt.s32.totalorder %s13, 3
      %p89 = pnand %p87, %p88
      %p90 = pneg %p89
      // Predicated region
      $region9: #{tpu_custom_call.1} parent=5 // pred_check
        _
      $region10: #{tpu_custom_call.1} parent=5 // pred_check_branch
        %92 = sbr.rel (%p89) target = $region12
      $region11: #{tpu_custom_call.1} parent=5 // pred_region
        %s93 = ssub.s32 %s13, 1
      $region12: #{tpu_custom_call.1} parent=5 // pred_fallthru
        _
      %p94 = scmp.lt.s32.totalorder %s13, 2
      // Predicated region
      $region13: #{tpu_custom_call.1} parent=5 // pred_check
        %p95 = pneg %p94
      $region14: #{tpu_custom_call.1} parent=5 // pred_check_branch
        %97 = sbr.rel (%p95) target = $region16
      $region15: #{tpu_custom_call.1} parent=5 // pred_region
        // Predicated region
        $region17: #{tpu_custom_call.1} parent=15 // pred_check
          %p98 = pneg %p47
        $region18: #{tpu_custom_call.1} parent=15 // pred_check_branch
          %100 = sbr.rel (%p98) target = $region20
        $region19: #{tpu_custom_call.1} parent=15 // pred_region
          %s101 = sand.u32 %s37, 1
          %s102 = scalar_lea.sflag [#allocation4], %s101
          %s103 = sand.u32 %s37, 1
          %s104 = smul.addr %s103, 256
          %s105 = scalar_lea.vmem [#allocation3], %s104
          %s106 = smul.u32 32, %s21
          %108 = vsyncadd %s102, 0
          %s109 = smul.addr %s20, 32
          %s110 = sadd.s32 %s106, %s109
          %s111 = smul.addr %s110, 8
          %s112 = scalar_lea.hbm %s0, %s111
          %s113 = sshll.u32 %s112, 4
          %s114 = int_to_ptr.hbm [resolvable:$true] %s113
          %s115 = sshll.u32 %s105, 4
          %s116 = int_to_ptr.vmem [resolvable:$true] %s115
          %121 = dma.hbm_to_vmem [thread:$0]  %s114, 4096, %s116, %s102, 128, 128, 8
        $region20: #{tpu_custom_call.1} parent=15 // pred_fallthru
          _
      $region16: #{tpu_custom_call.1} parent=5 // pred_fallthru
        _
      %p122 = scmp.le.s32.totalorder 1, %s13
      %p123 = scmp.lt.s32.totalorder %s13, 3
      %p124 = pnand %p122, %p123
      %p125 = pneg %p124
      // Predicated region
      $region21: #{tpu_custom_call.1} parent=5 // pred_check
        _
      $region22: #{tpu_custom_call.1} parent=5 // pred_check_branch
        %127 = sbr.rel (%p124) target = $region24
      $region23: #{tpu_custom_call.1} parent=5 // pred_region
        %s128 = ssub.s32 %s13, 1
        %s129 = sand.u32 %s40, 1
        %s130 = scalar_lea.sflag [#allocation4], %s129
        %s131 = sand.u32 %s40, 1
        %s132 = smul.addr %s131, 256
        %s133 = scalar_lea.vmem [#allocation3], %s132
        // Predicated region
        $region25: #{tpu_custom_call.1} parent=23 // pred_check
          %p134 = pneg %p53
        $region26: #{tpu_custom_call.1} parent=23 // pred_check_branch
          %136 = sbr.rel (%p134) target = $region28
        $region27: #{tpu_custom_call.1} parent=23 // pred_region
          %138 = dma.done %s130, 4096
        $region28: #{tpu_custom_call.1} parent=23 // pred_fallthru
          _
        %s139 = sand.u32 %s40, 1
        %s140 = scalar_lea.sflag [#allocation4], %s139
        %s141 = sand.u32 %s40, 1
        %s142 = smul.addr %s141, 256
        %s143 = scalar_lea.vmem [#allocation3], %s142
        %p144 = pneg %p53
        %p145 = pneg %p50
        %p146 = pneg %p79
        %p147 = pneg %p76
        %s148 = sand.u32 %s66, 1
        %s149 = scalar_lea.sflag [#allocation5], %s148
        %s150 = sand.u32 %s66, 1
        %s151 = smul.addr %s150, 128
        %s152 = scalar_lea.vmem [#allocation6], %s151
        %s153 = smul.u32 32, %s23
        %p154 = scmp.eq.s32.totalorder %s23, 0
        // Predicated region
        $region29: #{tpu_custom_call.1} parent=23 // pred_check
          %p155 = pneg %p154
        $region30: #{tpu_custom_call.1} parent=23 // pred_check_branch
          %157 = sbr.rel (%p155) target = $region32
        $region31: #{tpu_custom_call.1} parent=23 // pred_region
          %158 = vst [vmem:[#allocation2] sm:$0xff] 0.0
          %159 = vst [vmem:[#allocation2 + $0x8] sm:$0xff] 0.0
          %160 = vst [vmem:[#allocation2 + $0x10] sm:$0xff] 0.0
          %161 = vst [vmem:[#allocation2 + $0x18] sm:$0xff] 0.0
          %162 = vst [vmem:[#allocation2 + $0x20] sm:$0xff] 0.0
          %163 = vst [vmem:[#allocation2 + $0x28] sm:$0xff] 0.0
          %164 = vst [vmem:[#allocation2 + $0x30] sm:$0xff] 0.0
          %165 = vst [vmem:[#allocation2 + $0x38] sm:$0xff] 0.0
          %166 = vst [vmem:[#allocation2 + $0x40] sm:$0xff] 0.0
          %167 = vst [vmem:[#allocation2 + $0x48] sm:$0xff] 0.0
          %168 = vst [vmem:[#allocation2 + $0x50] sm:$0xff] 0.0
          %169 = vst [vmem:[#allocation2 + $0x58] sm:$0xff] 0.0
          %170 = vst [vmem:[#allocation2 + $0x60] sm:$0xff] 0.0
          %171 = vst [vmem:[#allocation2 + $0x68] sm:$0xff] 0.0
          %172 = vst [vmem:[#allocation2 + $0x70] sm:$0xff] 0.0
          %173 = vst [vmem:[#allocation2 + $0x78] sm:$0xff] 0.0
        $region32: #{tpu_custom_call.1} parent=23 // pred_fallthru
          _
        %v174 = vld [vmem:[%s133] sm:$0xff]
        %v175 = vld [vmem:[%s133 + $0x8] sm:$0xff]
        %v176 = vld [vmem:[%s133 + $0x10] sm:$0xff]
        %v177 = vld [vmem:[%s133 + $0x18] sm:$0xff]
        %v178 = vld [vmem:[%s133 + $0x20] sm:$0xff]
        %v179 = vld [vmem:[%s133 + $0x28] sm:$0xff]
        %v180 = vld [vmem:[%s133 + $0x30] sm:$0xff]
        %v181 = vld [vmem:[%s133 + $0x38] sm:$0xff]
        %v182 = vld [vmem:[%s133 + $0x40] sm:$0xff]
        %v183 = vld [vmem:[%s133 + $0x48] sm:$0xff]
        %v184 = vld [vmem:[%s133 + $0x50] sm:$0xff]
        %v185 = vld [vmem:[%s133 + $0x58] sm:$0xff]
        %v186 = vld [vmem:[%s133 + $0x60] sm:$0xff]
        %v187 = vld [vmem:[%s133 + $0x68] sm:$0xff]
        %v188 = vld [vmem:[%s133 + $0x70] sm:$0xff]
        %v189 = vld [vmem:[%s133 + $0x78] sm:$0xff]
        %v190 = vld [vmem:[%s133 + $0x80] sm:$0xff]
        %v191 = vld [vmem:[%s133 + $0x88] sm:$0xff]
        %v192 = vld [vmem:[%s133 + $0x90] sm:$0xff]
        %v193 = vld [vmem:[%s133 + $0x98] sm:$0xff]
        %v194 = vld [vmem:[%s133 + $0xa0] sm:$0xff]
        %v195 = vld [vmem:[%s133 + $0xa8] sm:$0xff]
        %v196 = vld [vmem:[%s133 + $0xb0] sm:$0xff]
        %v197 = vld [vmem:[%s133 + $0xb8] sm:$0xff]
        %v198 = vld [vmem:[%s133 + $0xc0] sm:$0xff]
        %v199 = vld [vmem:[%s133 + $0xc8] sm:$0xff]
        %v200 = vld [vmem:[%s133 + $0xd0] sm:$0xff]
        %v201 = vld [vmem:[%s133 + $0xd8] sm:$0xff]
        %v202 = vld [vmem:[%s133 + $0xe0] sm:$0xff]
        %v203 = vld [vmem:[%s133 + $0xe8] sm:$0xff]
        %v204 = vld [vmem:[%s133 + $0xf0] sm:$0xff]
        %v205 = vld [vmem:[%s133 + $0xf8] sm:$0xff]
        %v206 = vld [vmem:[#allocation2] sm:$0xff]
        %v207 = vld [vmem:[#allocation2 + $0x8] sm:$0xff]
        %v208 = vld [vmem:[#allocation2 + $0x10] sm:$0xff]
        %v209 = vld [vmem:[#allocation2 + $0x18] sm:$0xff]
        %v210 = vld [vmem:[#allocation2 + $0x20] sm:$0xff]
        %v211 = vld [vmem:[#allocation2 + $0x28] sm:$0xff]
        %v212 = vld [vmem:[#allocation2 + $0x30] sm:$0xff]
        %v213 = vld [vmem:[#allocation2 + $0x38] sm:$0xff]
        %v214 = vld [vmem:[#allocation2 + $0x40] sm:$0xff]
        %v215 = vld [vmem:[#allocation2 + $0x48] sm:$0xff]
        %v216 = vld [vmem:[#allocation2 + $0x50] sm:$0xff]
        %v217 = vld [vmem:[#allocation2 + $0x58] sm:$0xff]
        %v218 = vld [vmem:[#allocation2 + $0x60] sm:$0xff]
        %v219 = vld [vmem:[#allocation2 + $0x68] sm:$0xff]
        %v220 = vld [vmem:[#allocation2 + $0x70] sm:$0xff]
        %v221 = vld [vmem:[#allocation2 + $0x78] sm:$0xff]
        %222 = vxpose.xlu0.b32.start [1/16] %v174, 128
        %223 = vxpose.xlu0.b32.cont [2/16] %v175, 128
        %224 = vxpose.xlu0.b32.cont [3/16] %v176, 128
        %225 = vxpose.xlu0.b32.cont [4/16] %v177, 128
        %226 = vxpose.xlu0.b32.cont [5/16] %v178, 128
        %227 = vxpose.xlu0.b32.cont [6/16] %v179, 128
        %228 = vxpose.xlu0.b32.cont [7/16] %v180, 128
        %229 = vxpose.xlu0.b32.cont [8/16] %v181, 128
        %230 = vxpose.xlu0.b32.cont [9/16] %v182, 128
        %231 = vxpose.xlu0.b32.cont [10/16] %v183, 128
        %232 = vxpose.xlu0.b32.cont [11/16] %v184, 128
        %233 = vxpose.xlu0.b32.cont [12/16] %v185, 128
        %234 = vxpose.xlu0.b32.cont [13/16] %v186, 128
        %235 = vxpose.xlu0.b32.cont [14/16] %v187, 128
        %236 = vxpose.xlu0.b32.cont [15/16] %v188, 128
        %237 = vxpose.xlu0.b32.end [16/16] %v189, 128
        %v238 = vpop.trf.xlu0
        %v239 = vpop.trf.xlu0
        %v240 = vpop.trf.xlu0
        %v241 = vpop.trf.xlu0
        %v242 = vpop.trf.xlu0
        %v243 = vpop.trf.xlu0
        %v244 = vpop.trf.xlu0
        %v245 = vpop.trf.xlu0
        %v246 = vpop.trf.xlu0
        %v247 = vpop.trf.xlu0
        %v248 = vpop.trf.xlu0
        %v249 = vpop.trf.xlu0
        %v250 = vpop.trf.xlu0
        %v251 = vpop.trf.xlu0
        %v252 = vpop.trf.xlu0
        %v253 = vpop.trf.xlu0
        %254 = vxpose.xlu0.b32.start [1/16] %v190, 128
        %255 = vxpose.xlu0.b32.cont [2/16] %v191, 128
        %256 = vxpose.xlu0.b32.cont [3/16] %v192, 128
        %257 = vxpose.xlu0.b32.cont [4/16] %v193, 128
        %258 = vxpose.xlu0.b32.cont [5/16] %v194, 128
        %259 = vxpose.xlu0.b32.cont [6/16] %v195, 128
        %260 = vxpose.xlu0.b32.cont [7/16] %v196, 128
        %261 = vxpose.xlu0.b32.cont [8/16] %v197, 128
        %262 = vxpose.xlu0.b32.cont [9/16] %v198, 128
        %263 = vxpose.xlu0.b32.cont [10/16] %v199, 128
        %264 = vxpose.xlu0.b32.cont [11/16] %v200, 128
        %265 = vxpose.xlu0.b32.cont [12/16] %v201, 128
        %266 = vxpose.xlu0.b32.cont [13/16] %v202, 128
        %267 = vxpose.xlu0.b32.cont [14/16] %v203, 128
        %268 = vxpose.xlu0.b32.cont [15/16] %v204, 128
        %269 = vxpose.xlu0.b32.end [16/16] %v205, 128
        %v270 = vpop.trf.xlu0
        %v271 = vpop.trf.xlu0
        %v272 = vpop.trf.xlu0
        %v273 = vpop.trf.xlu0
        %v274 = vpop.trf.xlu0
        %v275 = vpop.trf.xlu0
        %v276 = vpop.trf.xlu0
        %v277 = vpop.trf.xlu0
        %v278 = vpop.trf.xlu0
        %v279 = vpop.trf.xlu0
        %v280 = vpop.trf.xlu0
        %v281 = vpop.trf.xlu0
        %v282 = vpop.trf.xlu0
        %v283 = vpop.trf.xlu0
        %v284 = vpop.trf.xlu0
        %v285 = vpop.trf.xlu0
        %v286 = vand.u32 %v189, 4294901760
        %287 = vmatpush.msra.mxu0 %v286
        %v288 = vand.u32 %v188, 4294901760
        %289 = vmatpush.msra.mxu0 %v288
        %v290 = vand.u32 %v187, 4294901760
        %291 = vmatpush.msra.mxu0 %v290
        %v292 = vand.u32 %v186, 4294901760
        %293 = vmatpush.msra.mxu0 %v292
        %v294 = vand.u32 %v185, 4294901760
        %295 = vmatpush.msra.mxu0 %v294
        %v296 = vand.u32 %v184, 4294901760
        %297 = vmatpush.msra.mxu0 %v296
        %v298 = vand.u32 %v183, 4294901760
        %299 = vmatpush.msra.mxu0 %v298
        %v300 = vand.u32 %v182, 4294901760
        %301 = vmatpush.msra.mxu0 %v300
        %v302 = vand.u32 %v181, 4294901760
        %303 = vmatpush.msra.mxu0 %v302
        %v304 = vand.u32 %v180, 4294901760
        %305 = vmatpush.msra.mxu0 %v304
        %v306 = vand.u32 %v179, 4294901760
        %307 = vmatpush.msra.mxu0 %v306
        %v308 = vand.u32 %v178, 4294901760
        %309 = vmatpush.msra.mxu0 %v308
        %v310 = vand.u32 %v177, 4294901760
        %311 = vmatpush.msra.mxu0 %v310
        %v312 = vand.u32 %v176, 4294901760
        %313 = vmatpush.msra.mxu0 %v312
        %v314 = vand.u32 %v175, 4294901760
        %315 = vmatpush.msra.mxu0 %v314
        %v316 = vand.u32 %v174, 4294901760
        %317 = vmatpush.msra.mxu0 %v316
        %v318 = vand.u32 %v238, 4294901760
        %v319 = vsub.f32 %v238, %v318
        %v320 = vand.u32 %v319, 4294901760
        %v321 = vsub.f32 %v319, %v320
        %v322 = vand.u32 %v321, 4294901760
        %323 = vmatmul.f32.gmra.mxu0 %v322
        %v324 = vpop.f32.mrf.mxu0
        %v325 = vadd.f32 0.0, %v324
        %v326 = vand.u32 %v239, 4294901760
        %v327 = vsub.f32 %v239, %v326
        %v328 = vand.u32 %v327, 4294901760
        %v329 = vsub.f32 %v327, %v328
        %v330 = vand.u32 %v329, 4294901760
        %331 = vmatmul.f32.gmra.mxu0 %v330
        %v332 = vpop.f32.mrf.mxu0
        %v333 = vadd.f32 0.0, %v332
        %v334 = vand.u32 %v240, 4294901760
        %v335 = vsub.f32 %v240, %v334
        %v336 = vand.u32 %v335, 4294901760
        %v337 = vsub.f32 %v335, %v336
        %v338 = vand.u32 %v337, 4294901760
        %339 = vmatmul.f32.gmra.mxu0 %v338
        %v340 = vpop.f32.mrf.mxu0
        %v341 = vadd.f32 0.0, %v340
        %v342 = vand.u32 %v241, 4294901760
        %v343 = vsub.f32 %v241, %v342
        %v344 = vand.u32 %v343, 4294901760
        %v345 = vsub.f32 %v343, %v344
        %v346 = vand.u32 %v345, 4294901760
        %347 = vmatmul.f32.gmra.mxu0 %v346
        %v348 = vpop.f32.mrf.mxu0
        %v349 = vadd.f32 0.0, %v348
        %v350 = vand.u32 %v242, 4294901760
        %v351 = vsub.f32 %v242, %v350
        %v352 = vand.u32 %v351, 4294901760
        %v353 = vsub.f32 %v351, %v352
        %v354 = vand.u32 %v353, 4294901760
        %355 = vmatmul.f32.gmra.mxu0 %v354
        %v356 = vpop.f32.mrf.mxu0
        %v357 = vadd.f32 0.0, %v356
        %v358 = vand.u32 %v243, 4294901760
        %v359 = vsub.f32 %v243, %v358
        %v360 = vand.u32 %v359, 4294901760
        %v361 = vsub.f32 %v359, %v360
        %v362 = vand.u32 %v361, 4294901760
        %363 = vmatmul.f32.gmra.mxu0 %v362
        %v364 = vpop.f32.mrf.mxu0
        %v365 = vadd.f32 0.0, %v364
        %v366 = vand.u32 %v244, 4294901760
        %v367 = vsub.f32 %v244, %v366
        %v368 = vand.u32 %v367, 4294901760
        %v369 = vsub.f32 %v367, %v368
        %v370 = vand.u32 %v369, 4294901760
        %371 = vmatmul.f32.gmra.mxu0 %v370
        %v372 = vpop.f32.mrf.mxu0
        %v373 = vadd.f32 0.0, %v372
        %v374 = vand.u32 %v245, 4294901760
        %v375 = vsub.f32 %v245, %v374
        %v376 = vand.u32 %v375, 4294901760
        %v377 = vsub.f32 %v375, %v376
        %v378 = vand.u32 %v377, 4294901760
        %379 = vmatmul.f32.gmra.mxu0 %v378
        %v380 = vpop.f32.mrf.mxu0
        %v381 = vadd.f32 0.0, %v380
        %v382 = vand.u32 %v246, 4294901760
        %v383 = vsub.f32 %v246, %v382
        %v384 = vand.u32 %v383, 4294901760
        %v385 = vsub.f32 %v383, %v384
        %v386 = vand.u32 %v385, 4294901760
        %387 = vmatmul.f32.gmra.mxu0 %v386
        %v388 = vpop.f32.mrf.mxu0
        %v389 = vadd.f32 0.0, %v388
        %v390 = vand.u32 %v247, 4294901760
        %v391 = vsub.f32 %v247, %v390
        %v392 = vand.u32 %v391, 4294901760
        %v393 = vsub.f32 %v391, %v392
        %v394 = vand.u32 %v393, 4294901760
        %395 = vmatmul.f32.gmra.mxu0 %v394
        %v396 = vpop.f32.mrf.mxu0
        %v397 = vadd.f32 0.0, %v396
        %v398 = vand.u32 %v248, 4294901760
        %v399 = vsub.f32 %v248, %v398
        %v400 = vand.u32 %v399, 4294901760
        %v401 = vsub.f32 %v399, %v400
        %v402 = vand.u32 %v401, 4294901760
        %403 = vmatmul.f32.gmra.mxu0 %v402
        %v404 = vpop.f32.mrf.mxu0
        %v405 = vadd.f32 0.0, %v404
        %v406 = vand.u32 %v249, 4294901760
        %v407 = vsub.f32 %v249, %v406
        %v408 = vand.u32 %v407, 4294901760
        %v409 = vsub.f32 %v407, %v408
        %v410 = vand.u32 %v409, 4294901760
        %411 = vmatmul.f32.gmra.mxu0 %v410
        %v412 = vpop.f32.mrf.mxu0
        %v413 = vadd.f32 0.0, %v412
        %v414 = vand.u32 %v250, 4294901760
        %v415 = vsub.f32 %v250, %v414
        %v416 = vand.u32 %v415, 4294901760
        %v417 = vsub.f32 %v415, %v416
        %v418 = vand.u32 %v417, 4294901760
        %419 = vmatmul.f32.gmra.mxu0 %v418
        %v420 = vpop.f32.mrf.mxu0
        %v421 = vadd.f32 0.0, %v420
        %v422 = vand.u32 %v251, 4294901760
        %v423 = vsub.f32 %v251, %v422
        %v424 = vand.u32 %v423, 4294901760
        %v425 = vsub.f32 %v423, %v424
        %v426 = vand.u32 %v425, 4294901760
        %427 = vmatmul.f32.gmra.mxu0 %v426
        %v428 = vpop.f32.mrf.mxu0
        %v429 = vadd.f32 0.0, %v428
        %v430 = vand.u32 %v252, 4294901760
        %v431 = vsub.f32 %v252, %v430
        %v432 = vand.u32 %v431, 4294901760
        %v433 = vsub.f32 %v431, %v432
        %v434 = vand.u32 %v433, 4294901760
        %435 = vmatmul.f32.gmra.mxu0 %v434
        %v436 = vpop.f32.mrf.mxu0
        %v437 = vadd.f32 0.0, %v436
        %v438 = vand.u32 %v253, 4294901760
        %v439 = vsub.f32 %v253, %v438
        %v440 = vand.u32 %v439, 4294901760
        %v441 = vsub.f32 %v439, %v440
        %v442 = vand.u32 %v441, 4294901760
        %443 = vmatmul.f32.gmra.mxu0 %v442
        %v444 = vpop.f32.mrf.mxu0
        %v445 = vadd.f32 0.0, %v444
        %446 = vdwg.mxu0
        %v447 = vand.u32 %v189, 4294901760
        %v448 = vsub.f32 %v189, %v447
        %v449 = vand.u32 %v448, 4294901760
        %v450 = vsub.f32 %v448, %v449
        %v451 = vand.u32 %v450, 4294901760
        %452 = vmatpush.msra.mxu0 %v451
        %v453 = vand.u32 %v188, 4294901760
        %v454 = vsub.f32 %v188, %v453
        %v455 = vand.u32 %v454, 4294901760
        %v456 = vsub.f32 %v454, %v455
        %v457 = vand.u32 %v456, 4294901760
        %458 = vmatpush.msra.mxu0 %v457
        %v459 = vand.u32 %v187, 4294901760
        %v460 = vsub.f32 %v187, %v459
        %v461 = vand.u32 %v460, 4294901760
        %v462 = vsub.f32 %v460, %v461
        %v463 = vand.u32 %v462, 4294901760
        %464 = vmatpush.msra.mxu0 %v463
        %v465 = vand.u32 %v186, 4294901760
        %v466 = vsub.f32 %v186, %v465
        %v467 = vand.u32 %v466, 4294901760
        %v468 = vsub.f32 %v466, %v467
        %v469 = vand.u32 %v468, 4294901760
        %470 = vmatpush.msra.mxu0 %v469
        %v471 = vand.u32 %v185, 4294901760
        %v472 = vsub.f32 %v185, %v471
        %v473 = vand.u32 %v472, 4294901760
        %v474 = vsub.f32 %v472, %v473
        %v475 = vand.u32 %v474, 4294901760
        %476 = vmatpush.msra.mxu0 %v475
        %v477 = vand.u32 %v184, 4294901760
        %v478 = vsub.f32 %v184, %v477
        %v479 = vand.u32 %v478, 4294901760
        %v480 = vsub.f32 %v478, %v479
        %v481 = vand.u32 %v480, 4294901760
        %482 = vmatpush.msra.mxu0 %v481
        %v483 = vand.u32 %v183, 4294901760
        %v484 = vsub.f32 %v183, %v483
        %v485 = vand.u32 %v484, 4294901760
        %v486 = vsub.f32 %v484, %v485
        %v487 = vand.u32 %v486, 4294901760
        %488 = vmatpush.msra.mxu0 %v487
        %v489 = vand.u32 %v182, 4294901760
        %v490 = vsub.f32 %v182, %v489
        %v491 = vand.u32 %v490, 4294901760
        %v492 = vsub.f32 %v490, %v491
        %v493 = vand.u32 %v492, 4294901760
        %494 = vmatpush.msra.mxu0 %v493
        %v495 = vand.u32 %v181, 4294901760
        %v496 = vsub.f32 %v181, %v495
        %v497 = vand.u32 %v496, 4294901760
        %v498 = vsub.f32 %v496, %v497
        %v499 = vand.u32 %v498, 4294901760
        %500 = vmatpush.msra.mxu0 %v499
        %v501 = vand.u32 %v180, 4294901760
        %v502 = vsub.f32 %v180, %v501
        %v503 = vand.u32 %v502, 4294901760
        %v504 = vsub.f32 %v502, %v503
        %v505 = vand.u32 %v504, 4294901760
        %506 = vmatpush.msra.mxu0 %v505
        %v507 = vand.u32 %v179, 4294901760
        %v508 = vsub.f32 %v179, %v507
        %v509 = vand.u32 %v508, 4294901760
        %v510 = vsub.f32 %v508, %v509
        %v511 = vand.u32 %v510, 4294901760
        %512 = vmatpush.msra.mxu0 %v511
        %v513 = vand.u32 %v178, 4294901760
        %v514 = vsub.f32 %v178, %v513
        %v515 = vand.u32 %v514, 4294901760
        %v516 = vsub.f32 %v514, %v515
        %v517 = vand.u32 %v516, 4294901760
        %518 = vmatpush.msra.mxu0 %v517
        %v519 = vand.u32 %v177, 4294901760
        %v520 = vsub.f32 %v177, %v519
        %v521 = vand.u32 %v520, 4294901760
        %v522 = vsub.f32 %v520, %v521
        %v523 = vand.u32 %v522, 4294901760
        %524 = vmatpush.msra.mxu0 %v523
        %v525 = vand.u32 %v176, 4294901760
        %v526 = vsub.f32 %v176, %v525
        %v527 = vand.u32 %v526, 4294901760
        %v528 = vsub.f32 %v526, %v527
        %v529 = vand.u32 %v528, 4294901760
        %530 = vmatpush.msra.mxu0 %v529
        %v531 = vand.u32 %v175, 4294901760
        %v532 = vsub.f32 %v175, %v531
        %v533 = vand.u32 %v532, 4294901760
        %v534 = vsub.f32 %v532, %v533
        %v535 = vand.u32 %v534, 4294901760
        %536 = vmatpush.msra.mxu0 %v535
        %v537 = vand.u32 %v174, 4294901760
        %v538 = vsub.f32 %v174, %v537
        %v539 = vand.u32 %v538, 4294901760
        %v540 = vsub.f32 %v538, %v539
        %v541 = vand.u32 %v540, 4294901760
        %542 = vmatpush.msra.mxu0 %v541
        %v543 = vand.u32 %v238, 4294901760
        %544 = vmatmul.f32.gmra.mxu0 %v543
        %v545 = vpop.f32.mrf.mxu0
        %v546 = vadd.f32 %v325, %v545
        %v547 = vand.u32 %v239, 4294901760
        %548 = vmatmul.f32.gmra.mxu0 %v547
        %v549 = vpop.f32.mrf.mxu0
        %v550 = vadd.f32 %v333, %v549
        %v551 = vand.u32 %v240, 4294901760
        %552 = vmatmul.f32.gmra.mxu0 %v551
        %v553 = vpop.f32.mrf.mxu0
        %v554 = vadd.f32 %v341, %v553
        %v555 = vand.u32 %v241, 4294901760
        %556 = vmatmul.f32.gmra.mxu0 %v555
        %v557 = vpop.f32.mrf.mxu0
        %v558 = vadd.f32 %v349, %v557
        %v559 = vand.u32 %v242, 4294901760
        %560 = vmatmul.f32.gmra.mxu0 %v559
        %v561 = vpop.f32.mrf.mxu0
        %v562 = vadd.f32 %v357, %v561
        %v563 = vand.u32 %v243, 4294901760
        %564 = vmatmul.f32.gmra.mxu0 %v563
        %v565 = vpop.f32.mrf.mxu0
        %v566 = vadd.f32 %v365, %v565
        %v567 = vand.u32 %v244, 4294901760
        %568 = vmatmul.f32.gmra.mxu0 %v567
        %v569 = vpop.f32.mrf.mxu0
        %v570 = vadd.f32 %v373, %v569
        %v571 = vand.u32 %v245, 4294901760
        %572 = vmatmul.f32.gmra.mxu0 %v571
        %v573 = vpop.f32.mrf.mxu0
        %v574 = vadd.f32 %v381, %v573
        %v575 = vand.u32 %v246, 4294901760
        %576 = vmatmul.f32.gmra.mxu0 %v575
        %v577 = vpop.f32.mrf.mxu0
        %v578 = vadd.f32 %v389, %v577
        %v579 = vand.u32 %v247, 4294901760
        %580 = vmatmul.f32.gmra.mxu0 %v579
        %v581 = vpop.f32.mrf.mxu0
        %v582 = vadd.f32 %v397, %v581
        %v583 = vand.u32 %v248, 4294901760
        %584 = vmatmul.f32.gmra.mxu0 %v583
        %v585 = vpop.f32.mrf.mxu0
        %v586 = vadd.f32 %v405, %v585
        %v587 = vand.u32 %v249, 4294901760
        %588 = vmatmul.f32.gmra.mxu0 %v587
        %v589 = vpop.f32.mrf.mxu0
        %v590 = vadd.f32 %v413, %v589
        %v591 = vand.u32 %v250, 4294901760
        %592 = vmatmul.f32.gmra.mxu0 %v591
        %v593 = vpop.f32.mrf.mxu0
        %v594 = vadd.f32 %v421, %v593
        %v595 = vand.u32 %v251, 4294901760
        %596 = vmatmul.f32.gmra.mxu0 %v595
        %v597 = vpop.f32.mrf.mxu0
        %v598 = vadd.f32 %v429, %v597
        %v599 = vand.u32 %v252, 4294901760
        %600 = vmatmul.f32.gmra.mxu0 %v599
        %v601 = vpop.f32.mrf.mxu0
        %v602 = vadd.f32 %v437, %v601
        %v603 = vand.u32 %v253, 4294901760
        %604 = vmatmul.f32.gmra.mxu0 %v603
        %v605 = vpop.f32.mrf.mxu0
        %v606 = vadd.f32 %v445, %v605
        %607 = vdwg.mxu0
        %v608 = vand.u32 %v189, 4294901760
        %v609 = vsub.f32 %v189, %v608
        %610 = vmatpush.msra.mxu0 %v609
        %v611 = vand.u32 %v188, 4294901760
        %v612 = vsub.f32 %v188, %v611
        %613 = vmatpush.msra.mxu0 %v612
        %v614 = vand.u32 %v187, 4294901760
        %v615 = vsub.f32 %v187, %v614
        %616 = vmatpush.msra.mxu0 %v615
        %v617 = vand.u32 %v186, 4294901760
        %v618 = vsub.f32 %v186, %v617
        %619 = vmatpush.msra.mxu0 %v618
        %v620 = vand.u32 %v185, 4294901760
        %v621 = vsub.f32 %v185, %v620
        %622 = vmatpush.msra.mxu0 %v621
        %v623 = vand.u32 %v184, 4294901760
        %v624 = vsub.f32 %v184, %v623
        %625 = vmatpush.msra.mxu0 %v624
        %v626 = vand.u32 %v183, 4294901760
        %v627 = vsub.f32 %v183, %v626
        %628 = vmatpush.msra.mxu0 %v627
        %v629 = vand.u32 %v182, 4294901760
        %v630 = vsub.f32 %v182, %v629
        %631 = vmatpush.msra.mxu0 %v630
        %v632 = vand.u32 %v181, 4294901760
        %v633 = vsub.f32 %v181, %v632
        %634 = vmatpush.msra.mxu0 %v633
        %v635 = vand.u32 %v180, 4294901760
        %v636 = vsub.f32 %v180, %v635
        %637 = vmatpush.msra.mxu0 %v636
        %v638 = vand.u32 %v179, 4294901760
        %v639 = vsub.f32 %v179, %v638
        %640 = vmatpush.msra.mxu0 %v639
        %v641 = vand.u32 %v178, 4294901760
        %v642 = vsub.f32 %v178, %v641
        %643 = vmatpush.msra.mxu0 %v642
        %v644 = vand.u32 %v177, 4294901760
        %v645 = vsub.f32 %v177, %v644
        %646 = vmatpush.msra.mxu0 %v645
        %v647 = vand.u32 %v176, 4294901760
        %v648 = vsub.f32 %v176, %v647
        %649 = vmatpush.msra.mxu0 %v648
        %v650 = vand.u32 %v175, 4294901760
        %v651 = vsub.f32 %v175, %v650
        %652 = vmatpush.msra.mxu0 %v651
        %v653 = vand.u32 %v174, 4294901760
        %v654 = vsub.f32 %v174, %v653
        %655 = vmatpush.msra.mxu0 %v654
        %v656 = vand.u32 %v238, 4294901760
        %v657 = vsub.f32 %v238, %v656
        %658 = vmatmul.f32.gmra.mxu0 %v657
        %v659 = vpop.f32.mrf.mxu0
        %v660 = vadd.f32 %v546, %v659
        %v661 = vand.u32 %v239, 4294901760
        %v662 = vsub.f32 %v239, %v661
        %663 = vmatmul.f32.gmra.mxu0 %v662
        %v664 = vpop.f32.mrf.mxu0
        %v665 = vadd.f32 %v550, %v664
        %v666 = vand.u32 %v240, 4294901760
        %v667 = vsub.f32 %v240, %v666
        %668 = vmatmul.f32.gmra.mxu0 %v667
        %v669 = vpop.f32.mrf.mxu0
        %v670 = vadd.f32 %v554, %v669
        %v671 = vand.u32 %v241, 4294901760
        %v672 = vsub.f32 %v241, %v671
        %673 = vmatmul.f32.gmra.mxu0 %v672
        %v674 = vpop.f32.mrf.mxu0
        %v675 = vadd.f32 %v558, %v674
        %v676 = vand.u32 %v242, 4294901760
        %v677 = vsub.f32 %v242, %v676
        %678 = vmatmul.f32.gmra.mxu0 %v677
        %v679 = vpop.f32.mrf.mxu0
        %v680 = vadd.f32 %v562, %v679
        %v681 = vand.u32 %v243, 4294901760
        %v682 = vsub.f32 %v243, %v681
        %683 = vmatmul.f32.gmra.mxu0 %v682
        %v684 = vpop.f32.mrf.mxu0
        %v685 = vadd.f32 %v566, %v684
        %v686 = vand.u32 %v244, 4294901760
        %v687 = vsub.f32 %v244, %v686
        %688 = vmatmul.f32.gmra.mxu0 %v687
        %v689 = vpop.f32.mrf.mxu0
        %v690 = vadd.f32 %v570, %v689
        %v691 = vand.u32 %v245, 4294901760
        %v692 = vsub.f32 %v245, %v691
        %693 = vmatmul.f32.gmra.mxu0 %v692
        %v694 = vpop.f32.mrf.mxu0
        %v695 = vadd.f32 %v574, %v694
        %v696 = vand.u32 %v246, 4294901760
        %v697 = vsub.f32 %v246, %v696
        %698 = vmatmul.f32.gmra.mxu0 %v697
        %v699 = vpop.f32.mrf.mxu0
        %v700 = vadd.f32 %v578, %v699
        %v701 = vand.u32 %v247, 4294901760
        %v702 = vsub.f32 %v247, %v701
        %703 = vmatmul.f32.gmra.mxu0 %v702
        %v704 = vpop.f32.mrf.mxu0
        %v705 = vadd.f32 %v582, %v704
        %v706 = vand.u32 %v248, 4294901760
        %v707 = vsub.f32 %v248, %v706
        %708 = vmatmul.f32.gmra.mxu0 %v707
        %v709 = vpop.f32.mrf.mxu0
        %v710 = vadd.f32 %v586, %v709
        %v711 = vand.u32 %v249, 4294901760
        %v712 = vsub.f32 %v249, %v711
        %713 = vmatmul.f32.gmra.mxu0 %v712
        %v714 = vpop.f32.mrf.mxu0
        %v715 = vadd.f32 %v590, %v714
        %v716 = vand.u32 %v250, 4294901760
        %v717 = vsub.f32 %v250, %v716
        %718 = vmatmul.f32.gmra.mxu0 %v717
        %v719 = vpop.f32.mrf.mxu0
        %v720 = vadd.f32 %v594, %v719
        %v721 = vand.u32 %v251, 4294901760
        %v722 = vsub.f32 %v251, %v721
        %723 = vmatmul.f32.gmra.mxu0 %v722
        %v724 = vpop.f32.mrf.mxu0
        %v725 = vadd.f32 %v598, %v724
        %v726 = vand.u32 %v252, 4294901760
        %v727 = vsub.f32 %v252, %v726
        %728 = vmatmul.f32.gmra.mxu0 %v727
        %v729 = vpop.f32.mrf.mxu0
        %v730 = vadd.f32 %v602, %v729
        %v731 = vand.u32 %v253, 4294901760
        %v732 = vsub.f32 %v253, %v731
        %733 = vmatmul.f32.gmra.mxu0 %v732
        %v734 = vpop.f32.mrf.mxu0
        %v735 = vadd.f32 %v606, %v734
        %736 = vdwg.mxu0
        %v737 = vand.u32 %v189, 4294901760
        %738 = vmatpush.msra.mxu0 %v737
        %v739 = vand.u32 %v188, 4294901760
        %740 = vmatpush.msra.mxu0 %v739
        %v741 = vand.u32 %v187, 4294901760
        %742 = vmatpush.msra.mxu0 %v741
        %v743 = vand.u32 %v186, 4294901760
        %744 = vmatpush.msra.mxu0 %v743
        %v745 = vand.u32 %v185, 4294901760
        %746 = vmatpush.msra.mxu0 %v745
        %v747 = vand.u32 %v184, 4294901760
        %748 = vmatpush.msra.mxu0 %v747
        %v749 = vand.u32 %v183, 4294901760
        %750 = vmatpush.msra.mxu0 %v749
        %v751 = vand.u32 %v182, 4294901760
        %752 = vmatpush.msra.mxu0 %v751
        %v753 = vand.u32 %v181, 4294901760
        %754 = vmatpush.msra.mxu0 %v753
        %v755 = vand.u32 %v180, 4294901760
        %756 = vmatpush.msra.mxu0 %v755
        %v757 = vand.u32 %v179, 4294901760
        %758 = vmatpush.msra.mxu0 %v757
        %v759 = vand.u32 %v178, 4294901760
        %760 = vmatpush.msra.mxu0 %v759
        %v761 = vand.u32 %v177, 4294901760
        %762 = vmatpush.msra.mxu0 %v761
        %v763 = vand.u32 %v176, 4294901760
        %764 = vmatpush.msra.mxu0 %v763
        %v765 = vand.u32 %v175, 4294901760
        %766 = vmatpush.msra.mxu0 %v765
        %v767 = vand.u32 %v174, 4294901760
        %768 = vmatpush.msra.mxu0 %v767
        %v769 = vand.u32 %v238, 4294901760
        %v770 = vsub.f32 %v238, %v769
        %v771 = vand.u32 %v770, 4294901760
        %772 = vmatmul.f32.gmra.mxu0 %v771
        %v773 = vpop.f32.mrf.mxu0
        %v774 = vadd.f32 %v660, %v773
        %v775 = vand.u32 %v239, 4294901760
        %v776 = vsub.f32 %v239, %v775
        %v777 = vand.u32 %v776, 4294901760
        %778 = vmatmul.f32.gmra.mxu0 %v777
        %v779 = vpop.f32.mrf.mxu0
        %v780 = vadd.f32 %v665, %v779
        %v781 = vand.u32 %v240, 4294901760
        %v782 = vsub.f32 %v240, %v781
        %v783 = vand.u32 %v782, 4294901760
        %784 = vmatmul.f32.gmra.mxu0 %v783
        %v785 = vpop.f32.mrf.mxu0
        %v786 = vadd.f32 %v670, %v785
        %v787 = vand.u32 %v241, 4294901760
        %v788 = vsub.f32 %v241, %v787
        %v789 = vand.u32 %v788, 4294901760
        %790 = vmatmul.f32.gmra.mxu0 %v789
        %v791 = vpop.f32.mrf.mxu0
        %v792 = vadd.f32 %v675, %v791
        %v793 = vand.u32 %v242, 4294901760
        %v794 = vsub.f32 %v242, %v793
        %v795 = vand.u32 %v794, 4294901760
        %796 = vmatmul.f32.gmra.mxu0 %v795
        %v797 = vpop.f32.mrf.mxu0
        %v798 = vadd.f32 %v680, %v797
        %v799 = vand.u32 %v243, 4294901760
        %v800 = vsub.f32 %v243, %v799
        %v801 = vand.u32 %v800, 4294901760
        %802 = vmatmul.f32.gmra.mxu0 %v801
        %v803 = vpop.f32.mrf.mxu0
        %v804 = vadd.f32 %v685, %v803
        %v805 = vand.u32 %v244, 4294901760
        %v806 = vsub.f32 %v244, %v805
        %v807 = vand.u32 %v806, 4294901760
        %808 = vmatmul.f32.gmra.mxu0 %v807
        %v809 = vpop.f32.mrf.mxu0
        %v810 = vadd.f32 %v690, %v809
        %v811 = vand.u32 %v245, 4294901760
        %v812 = vsub.f32 %v245, %v811
        %v813 = vand.u32 %v812, 4294901760
        %814 = vmatmul.f32.gmra.mxu0 %v813
        %v815 = vpop.f32.mrf.mxu0
        %v816 = vadd.f32 %v695, %v815
        %v817 = vand.u32 %v246, 4294901760
        %v818 = vsub.f32 %v246, %v817
        %v819 = vand.u32 %v818, 4294901760
        %820 = vmatmul.f32.gmra.mxu0 %v819
        %v821 = vpop.f32.mrf.mxu0
        %v822 = vadd.f32 %v700, %v821
        %v823 = vand.u32 %v247, 4294901760
        %v824 = vsub.f32 %v247, %v823
        %v825 = vand.u32 %v824, 4294901760
        %826 = vmatmul.f32.gmra.mxu0 %v825
        %v827 = vpop.f32.mrf.mxu0
        %v828 = vadd.f32 %v705, %v827
        %v829 = vand.u32 %v248, 4294901760
        %v830 = vsub.f32 %v248, %v829
        %v831 = vand.u32 %v830, 4294901760
        %832 = vmatmul.f32.gmra.mxu0 %v831
        %v833 = vpop.f32.mrf.mxu0
        %v834 = vadd.f32 %v710, %v833
        %v835 = vand.u32 %v249, 4294901760
        %v836 = vsub.f32 %v249, %v835
        %v837 = vand.u32 %v836, 4294901760
        %838 = vmatmul.f32.gmra.mxu0 %v837
        %v839 = vpop.f32.mrf.mxu0
        %v840 = vadd.f32 %v715, %v839
        %v841 = vand.u32 %v250, 4294901760
        %v842 = vsub.f32 %v250, %v841
        %v843 = vand.u32 %v842, 4294901760
        %844 = vmatmul.f32.gmra.mxu0 %v843
        %v845 = vpop.f32.mrf.mxu0
        %v846 = vadd.f32 %v720, %v845
        %v847 = vand.u32 %v251, 4294901760
        %v848 = vsub.f32 %v251, %v847
        %v849 = vand.u32 %v848, 4294901760
        %850 = vmatmul.f32.gmra.mxu0 %v849
        %v851 = vpop.f32.mrf.mxu0
        %v852 = vadd.f32 %v725, %v851
        %v853 = vand.u32 %v252, 4294901760
        %v854 = vsub.f32 %v252, %v853
        %v855 = vand.u32 %v854, 4294901760
        %856 = vmatmul.f32.gmra.mxu0 %v855
        %v857 = vpop.f32.mrf.mxu0
        %v858 = vadd.f32 %v730, %v857
        %v859 = vand.u32 %v253, 4294901760
        %v860 = vsub.f32 %v253, %v859
        %v861 = vand.u32 %v860, 4294901760
        %862 = vmatmul.f32.gmra.mxu0 %v861
        %v863 = vpop.f32.mrf.mxu0
        %v864 = vadd.f32 %v735, %v863
        %865 = vdwg.mxu0
        %v866 = vand.u32 %v189, 4294901760
        %v867 = vsub.f32 %v189, %v866
        %v868 = vand.u32 %v867, 4294901760
        %869 = vmatpush.msra.mxu0 %v868
        %v870 = vand.u32 %v188, 4294901760
        %v871 = vsub.f32 %v188, %v870
        %v872 = vand.u32 %v871, 4294901760
        %873 = vmatpush.msra.mxu0 %v872
        %v874 = vand.u32 %v187, 4294901760
        %v875 = vsub.f32 %v187, %v874
        %v876 = vand.u32 %v875, 4294901760
        %877 = vmatpush.msra.mxu0 %v876
        %v878 = vand.u32 %v186, 4294901760
        %v879 = vsub.f32 %v186, %v878
        %v880 = vand.u32 %v879, 4294901760
        %881 = vmatpush.msra.mxu0 %v880
        %v882 = vand.u32 %v185, 4294901760
        %v883 = vsub.f32 %v185, %v882
        %v884 = vand.u32 %v883, 4294901760
        %885 = vmatpush.msra.mxu0 %v884
        %v886 = vand.u32 %v184, 4294901760
        %v887 = vsub.f32 %v184, %v886
        %v888 = vand.u32 %v887, 4294901760
        %889 = vmatpush.msra.mxu0 %v888
        %v890 = vand.u32 %v183, 4294901760
        %v891 = vsub.f32 %v183, %v890
        %v892 = vand.u32 %v891, 4294901760
        %893 = vmatpush.msra.mxu0 %v892
        %v894 = vand.u32 %v182, 4294901760
        %v895 = vsub.f32 %v182, %v894
        %v896 = vand.u32 %v895, 4294901760
        %897 = vmatpush.msra.mxu0 %v896
        %v898 = vand.u32 %v181, 4294901760
        %v899 = vsub.f32 %v181, %v898
        %v900 = vand.u32 %v899, 4294901760
        %901 = vmatpush.msra.mxu0 %v900
        %v902 = vand.u32 %v180, 4294901760
        %v903 = vsub.f32 %v180, %v902
        %v904 = vand.u32 %v903, 4294901760
        %905 = vmatpush.msra.mxu0 %v904
        %v906 = vand.u32 %v179, 4294901760
        %v907 = vsub.f32 %v179, %v906
        %v908 = vand.u32 %v907, 4294901760
        %909 = vmatpush.msra.mxu0 %v908
        %v910 = vand.u32 %v178, 4294901760
        %v911 = vsub.f32 %v178, %v910
        %v912 = vand.u32 %v911, 4294901760
        %913 = vmatpush.msra.mxu0 %v912
        %v914 = vand.u32 %v177, 4294901760
        %v915 = vsub.f32 %v177, %v914
        %v916 = vand.u32 %v915, 4294901760
        %917 = vmatpush.msra.mxu0 %v916
        %v918 = vand.u32 %v176, 4294901760
        %v919 = vsub.f32 %v176, %v918
        %v920 = vand.u32 %v919, 4294901760
        %921 = vmatpush.msra.mxu0 %v920
        %v922 = vand.u32 %v175, 4294901760
        %v923 = vsub.f32 %v175, %v922
        %v924 = vand.u32 %v923, 4294901760
        %925 = vmatpush.msra.mxu0 %v924
        %v926 = vand.u32 %v174, 4294901760
        %v927 = vsub.f32 %v174, %v926
        %v928 = vand.u32 %v927, 4294901760
        %929 = vmatpush.msra.mxu0 %v928
        %v930 = vand.u32 %v238, 4294901760
        %931 = vmatmul.f32.gmra.mxu0 %v930
        %v932 = vpop.f32.mrf.mxu0
        %v933 = vadd.f32 %v774, %v932
        %v934 = vand.u32 %v239, 4294901760
        %935 = vmatmul.f32.gmra.mxu0 %v934
        %v936 = vpop.f32.mrf.mxu0
        %v937 = vadd.f32 %v780, %v936
        %v938 = vand.u32 %v240, 4294901760
        %939 = vmatmul.f32.gmra.mxu0 %v938
        %v940 = vpop.f32.mrf.mxu0
        %v941 = vadd.f32 %v786, %v940
        %v942 = vand.u32 %v241, 4294901760
        %943 = vmatmul.f32.gmra.mxu0 %v942
        %v944 = vpop.f32.mrf.mxu0
        %v945 = vadd.f32 %v792, %v944
        %v946 = vand.u32 %v242, 4294901760
        %947 = vmatmul.f32.gmra.mxu0 %v946
        %v948 = vpop.f32.mrf.mxu0
        %v949 = vadd.f32 %v798, %v948
        %v950 = vand.u32 %v243, 4294901760
        %951 = vmatmul.f32.gmra.mxu0 %v950
        %v952 = vpop.f32.mrf.mxu0
        %v953 = vadd.f32 %v804, %v952
        %v954 = vand.u32 %v244, 4294901760
        %955 = vmatmul.f32.gmra.mxu0 %v954
        %v956 = vpop.f32.mrf.mxu0
        %v957 = vadd.f32 %v810, %v956
        %v958 = vand.u32 %v245, 4294901760
        %959 = vmatmul.f32.gmra.mxu0 %v958
        %v960 = vpop.f32.mrf.mxu0
        %v961 = vadd.f32 %v816, %v960
        %v962 = vand.u32 %v246, 4294901760
        %963 = vmatmul.f32.gmra.mxu0 %v962
        %v964 = vpop.f32.mrf.mxu0
        %v965 = vadd.f32 %v822, %v964
        %v966 = vand.u32 %v247, 4294901760
        %967 = vmatmul.f32.gmra.mxu0 %v966
        %v968 = vpop.f32.mrf.mxu0
        %v969 = vadd.f32 %v828, %v968
        %v970 = vand.u32 %v248, 4294901760
        %971 = vmatmul.f32.gmra.mxu0 %v970
        %v972 = vpop.f32.mrf.mxu0
        %v973 = vadd.f32 %v834, %v972
        %v974 = vand.u32 %v249, 4294901760
        %975 = vmatmul.f32.gmra.mxu0 %v974
        %v976 = vpop.f32.mrf.mxu0
        %v977 = vadd.f32 %v840, %v976
        %v978 = vand.u32 %v250, 4294901760
        %979 = vmatmul.f32.gmra.mxu0 %v978
        %v980 = vpop.f32.mrf.mxu0
        %v981 = vadd.f32 %v846, %v980
        %v982 = vand.u32 %v251, 4294901760
        %983 = vmatmul.f32.gmra.mxu0 %v982
        %v984 = vpop.f32.mrf.mxu0
        %v985 = vadd.f32 %v852, %v984
        %v986 = vand.u32 %v252, 4294901760
        %987 = vmatmul.f32.gmra.mxu0 %v986
        %v988 = vpop.f32.mrf.mxu0
        %v989 = vadd.f32 %v858, %v988
        %v990 = vand.u32 %v253, 4294901760
        %991 = vmatmul.f32.gmra.mxu0 %v990
        %v992 = vpop.f32.mrf.mxu0
        %v993 = vadd.f32 %v864, %v992
        %994 = vdwg.mxu0
        %v995 = vand.u32 %v189, 4294901760
        %996 = vmatpush.msra.mxu0 %v995
        %v997 = vand.u32 %v188, 4294901760
        %998 = vmatpush.msra.mxu0 %v997
        %v999 = vand.u32 %v187, 4294901760
        %1000 = vmatpush.msra.mxu0 %v999
        %v1001 = vand.u32 %v186, 4294901760
        %1002 = vmatpush.msra.mxu0 %v1001
        %v1003 = vand.u32 %v185, 4294901760
        %1004 = vmatpush.msra.mxu0 %v1003
        %v1005 = vand.u32 %v184, 4294901760
        %1006 = vmatpush.msra.mxu0 %v1005
        %v1007 = vand.u32 %v183, 4294901760
        %1008 = vmatpush.msra.mxu0 %v1007
        %v1009 = vand.u32 %v182, 4294901760
        %1010 = vmatpush.msra.mxu0 %v1009
        %v1011 = vand.u32 %v181, 4294901760
        %1012 = vmatpush.msra.mxu0 %v1011
        %v1013 = vand.u32 %v180, 4294901760
        %1014 = vmatpush.msra.mxu0 %v1013
        %v1015 = vand.u32 %v179, 4294901760
        %1016 = vmatpush.msra.mxu0 %v1015
        %v1017 = vand.u32 %v178, 4294901760
        %1018 = vmatpush.msra.mxu0 %v1017
        %v1019 = vand.u32 %v177, 4294901760
        %1020 = vmatpush.msra.mxu0 %v1019
        %v1021 = vand.u32 %v176, 4294901760
        %1022 = vmatpush.msra.mxu0 %v1021
        %v1023 = vand.u32 %v175, 4294901760
        %1024 = vmatpush.msra.mxu0 %v1023
        %v1025 = vand.u32 %v174, 4294901760
        %1026 = vmatpush.msra.mxu0 %v1025
        %v1027 = vand.u32 %v238, 4294901760
        %1028 = vmatmul.f32.gmra.mxu0 %v1027
        %v1029 = vpop.f32.mrf.mxu0
        %v1030 = vadd.f32 %v933, %v1029
        %v1031 = vand.u32 %v239, 4294901760
        %1032 = vmatmul.f32.gmra.mxu0 %v1031
        %v1033 = vpop.f32.mrf.mxu0
        %v1034 = vadd.f32 %v937, %v1033
        %v1035 = vand.u32 %v240, 4294901760
        %1036 = vmatmul.f32.gmra.mxu0 %v1035
        %v1037 = vpop.f32.mrf.mxu0
        %v1038 = vadd.f32 %v941, %v1037
        %v1039 = vand.u32 %v241, 4294901760
        %1040 = vmatmul.f32.gmra.mxu0 %v1039
        %v1041 = vpop.f32.mrf.mxu0
        %v1042 = vadd.f32 %v945, %v1041
        %v1043 = vand.u32 %v242, 4294901760
        %1044 = vmatmul.f32.gmra.mxu0 %v1043
        %v1045 = vpop.f32.mrf.mxu0
        %v1046 = vadd.f32 %v949, %v1045
        %v1047 = vand.u32 %v243, 4294901760
        %1048 = vmatmul.f32.gmra.mxu0 %v1047
        %v1049 = vpop.f32.mrf.mxu0
        %v1050 = vadd.f32 %v953, %v1049
        %v1051 = vand.u32 %v244, 4294901760
        %1052 = vmatmul.f32.gmra.mxu0 %v1051
        %v1053 = vpop.f32.mrf.mxu0
        %v1054 = vadd.f32 %v957, %v1053
        %v1055 = vand.u32 %v245, 4294901760
        %1056 = vmatmul.f32.gmra.mxu0 %v1055
        %v1057 = vpop.f32.mrf.mxu0
        %v1058 = vadd.f32 %v961, %v1057
        %v1059 = vand.u32 %v246, 4294901760
        %1060 = vmatmul.f32.gmra.mxu0 %v1059
        %v1061 = vpop.f32.mrf.mxu0
        %v1062 = vadd.f32 %v965, %v1061
        %v1063 = vand.u32 %v247, 4294901760
        %1064 = vmatmul.f32.gmra.mxu0 %v1063
        %v1065 = vpop.f32.mrf.mxu0
        %v1066 = vadd.f32 %v969, %v1065
        %v1067 = vand.u32 %v248, 4294901760
        %1068 = vmatmul.f32.gmra.mxu0 %v1067
        %v1069 = vpop.f32.mrf.mxu0
        %v1070 = vadd.f32 %v973, %v1069
        %v1071 = vand.u32 %v249, 4294901760
        %1072 = vmatmul.f32.gmra.mxu0 %v1071
        %v1073 = vpop.f32.mrf.mxu0
        %v1074 = vadd.f32 %v977, %v1073
        %v1075 = vand.u32 %v250, 4294901760
        %1076 = vmatmul.f32.gmra.mxu0 %v1075
        %v1077 = vpop.f32.mrf.mxu0
        %v1078 = vadd.f32 %v981, %v1077
        %v1079 = vand.u32 %v251, 4294901760
        %1080 = vmatmul.f32.gmra.mxu0 %v1079
        %v1081 = vpop.f32.mrf.mxu0
        %v1082 = vadd.f32 %v985, %v1081
        %v1083 = vand.u32 %v252, 4294901760
        %1084 = vmatmul.f32.gmra.mxu0 %v1083
        %v1085 = vpop.f32.mrf.mxu0
        %v1086 = vadd.f32 %v989, %v1085
        %v1087 = vand.u32 %v253, 4294901760
        %1088 = vmatmul.f32.gmra.mxu0 %v1087
        %v1089 = vpop.f32.mrf.mxu0
        %v1090 = vadd.f32 %v993, %v1089
        %1091 = vdwg.mxu0
        %v1092 = vand.u32 %v205, 4294901760
        %1093 = vmatpush.msra.mxu0 %v1092
        %v1094 = vand.u32 %v204, 4294901760
        %1095 = vmatpush.msra.mxu0 %v1094
        %v1096 = vand.u32 %v203, 4294901760
        %1097 = vmatpush.msra.mxu0 %v1096
        %v1098 = vand.u32 %v202, 4294901760
        %1099 = vmatpush.msra.mxu0 %v1098
        %v1100 = vand.u32 %v201, 4294901760
        %1101 = vmatpush.msra.mxu0 %v1100
        %v1102 = vand.u32 %v200, 4294901760
        %1103 = vmatpush.msra.mxu0 %v1102
        %v1104 = vand.u32 %v199, 4294901760
        %1105 = vmatpush.msra.mxu0 %v1104
        %v1106 = vand.u32 %v198, 4294901760
        %1107 = vmatpush.msra.mxu0 %v1106
        %v1108 = vand.u32 %v197, 4294901760
        %1109 = vmatpush.msra.mxu0 %v1108
        %v1110 = vand.u32 %v196, 4294901760
        %1111 = vmatpush.msra.mxu0 %v1110
        %v1112 = vand.u32 %v195, 4294901760
        %1113 = vmatpush.msra.mxu0 %v1112
        %v1114 = vand.u32 %v194, 4294901760
        %1115 = vmatpush.msra.mxu0 %v1114
        %v1116 = vand.u32 %v193, 4294901760
        %1117 = vmatpush.msra.mxu0 %v1116
        %v1118 = vand.u32 %v192, 4294901760
        %1119 = vmatpush.msra.mxu0 %v1118
        %v1120 = vand.u32 %v191, 4294901760
        %1121 = vmatpush.msra.mxu0 %v1120
        %v1122 = vand.u32 %v190, 4294901760
        %1123 = vmatpush.msra.mxu0 %v1122
        %v1124 = vand.u32 %v270, 4294901760
        %v1125 = vsub.f32 %v270, %v1124
        %v1126 = vand.u32 %v1125, 4294901760
        %v1127 = vsub.f32 %v1125, %v1126
        %v1128 = vand.u32 %v1127, 4294901760
        %1129 = vmatmul.f32.gmra.mxu0 %v1128
        %v1130 = vpop.f32.mrf.mxu0
        %v1131 = vadd.f32 %v1030, %v1130
        %v1132 = vand.u32 %v271, 4294901760
        %v1133 = vsub.f32 %v271, %v1132
        %v1134 = vand.u32 %v1133, 4294901760
        %v1135 = vsub.f32 %v1133, %v1134
        %v1136 = vand.u32 %v1135, 4294901760
        %1137 = vmatmul.f32.gmra.mxu0 %v1136
        %v1138 = vpop.f32.mrf.mxu0
        %v1139 = vadd.f32 %v1034, %v1138
        %v1140 = vand.u32 %v272, 4294901760
        %v1141 = vsub.f32 %v272, %v1140
        %v1142 = vand.u32 %v1141, 4294901760
        %v1143 = vsub.f32 %v1141, %v1142
        %v1144 = vand.u32 %v1143, 4294901760
        %1145 = vmatmul.f32.gmra.mxu0 %v1144
        %v1146 = vpop.f32.mrf.mxu0
        %v1147 = vadd.f32 %v1038, %v1146
        %v1148 = vand.u32 %v273, 4294901760
        %v1149 = vsub.f32 %v273, %v1148
        %v1150 = vand.u32 %v1149, 4294901760
        %v1151 = vsub.f32 %v1149, %v1150
        %v1152 = vand.u32 %v1151, 4294901760
        %1153 = vmatmul.f32.gmra.mxu0 %v1152
        %v1154 = vpop.f32.mrf.mxu0
        %v1155 = vadd.f32 %v1042, %v1154
        %v1156 = vand.u32 %v274, 4294901760
        %v1157 = vsub.f32 %v274, %v1156
        %v1158 = vand.u32 %v1157, 4294901760
        %v1159 = vsub.f32 %v1157, %v1158
        %v1160 = vand.u32 %v1159, 4294901760
        %1161 = vmatmul.f32.gmra.mxu0 %v1160
        %v1162 = vpop.f32.mrf.mxu0
        %v1163 = vadd.f32 %v1046, %v1162
        %v1164 = vand.u32 %v275, 4294901760
        %v1165 = vsub.f32 %v275, %v1164
        %v1166 = vand.u32 %v1165, 4294901760
        %v1167 = vsub.f32 %v1165, %v1166
        %v1168 = vand.u32 %v1167, 4294901760
        %1169 = vmatmul.f32.gmra.mxu0 %v1168
        %v1170 = vpop.f32.mrf.mxu0
        %v1171 = vadd.f32 %v1050, %v1170
        %v1172 = vand.u32 %v276, 4294901760
        %v1173 = vsub.f32 %v276, %v1172
        %v1174 = vand.u32 %v1173, 4294901760
        %v1175 = vsub.f32 %v1173, %v1174
        %v1176 = vand.u32 %v1175, 4294901760
        %1177 = vmatmul.f32.gmra.mxu0 %v1176
        %v1178 = vpop.f32.mrf.mxu0
        %v1179 = vadd.f32 %v1054, %v1178
        %v1180 = vand.u32 %v277, 4294901760
        %v1181 = vsub.f32 %v277, %v1180
        %v1182 = vand.u32 %v1181, 4294901760
        %v1183 = vsub.f32 %v1181, %v1182
        %v1184 = vand.u32 %v1183, 4294901760
        %1185 = vmatmul.f32.gmra.mxu0 %v1184
        %v1186 = vpop.f32.mrf.mxu0
        %v1187 = vadd.f32 %v1058, %v1186
        %v1188 = vand.u32 %v278, 4294901760
        %v1189 = vsub.f32 %v278, %v1188
        %v1190 = vand.u32 %v1189, 4294901760
        %v1191 = vsub.f32 %v1189, %v1190
        %v1192 = vand.u32 %v1191, 4294901760
        %1193 = vmatmul.f32.gmra.mxu0 %v1192
        %v1194 = vpop.f32.mrf.mxu0
        %v1195 = vadd.f32 %v1062, %v1194
        %v1196 = vand.u32 %v279, 4294901760
        %v1197 = vsub.f32 %v279, %v1196
        %v1198 = vand.u32 %v1197, 4294901760
        %v1199 = vsub.f32 %v1197, %v1198
        %v1200 = vand.u32 %v1199, 4294901760
        %1201 = vmatmul.f32.gmra.mxu0 %v1200
        %v1202 = vpop.f32.mrf.mxu0
        %v1203 = vadd.f32 %v1066, %v1202
        %v1204 = vand.u32 %v280, 4294901760
        %v1205 = vsub.f32 %v280, %v1204
        %v1206 = vand.u32 %v1205, 4294901760
        %v1207 = vsub.f32 %v1205, %v1206
        %v1208 = vand.u32 %v1207, 4294901760
        %1209 = vmatmul.f32.gmra.mxu0 %v1208
        %v1210 = vpop.f32.mrf.mxu0
        %v1211 = vadd.f32 %v1070, %v1210
        %v1212 = vand.u32 %v281, 4294901760
        %v1213 = vsub.f32 %v281, %v1212
        %v1214 = vand.u32 %v1213, 4294901760
        %v1215 = vsub.f32 %v1213, %v1214
        %v1216 = vand.u32 %v1215, 4294901760
        %1217 = vmatmul.f32.gmra.mxu0 %v1216
        %v1218 = vpop.f32.mrf.mxu0
        %v1219 = vadd.f32 %v1074, %v1218
        %v1220 = vand.u32 %v282, 4294901760
        %v1221 = vsub.f32 %v282, %v1220
        %v1222 = vand.u32 %v1221, 4294901760
        %v1223 = vsub.f32 %v1221, %v1222
        %v1224 = vand.u32 %v1223, 4294901760
        %1225 = vmatmul.f32.gmra.mxu0 %v1224
        %v1226 = vpop.f32.mrf.mxu0
        %v1227 = vadd.f32 %v1078, %v1226
        %v1228 = vand.u32 %v283, 4294901760
        %v1229 = vsub.f32 %v283, %v1228
        %v1230 = vand.u32 %v1229, 4294901760
        %v1231 = vsub.f32 %v1229, %v1230
        %v1232 = vand.u32 %v1231, 4294901760
        %1233 = vmatmul.f32.gmra.mxu0 %v1232
        %v1234 = vpop.f32.mrf.mxu0
        %v1235 = vadd.f32 %v1082, %v1234
        %v1236 = vand.u32 %v284, 4294901760
        %v1237 = vsub.f32 %v284, %v1236
        %v1238 = vand.u32 %v1237, 4294901760
        %v1239 = vsub.f32 %v1237, %v1238
        %v1240 = vand.u32 %v1239, 4294901760
        %1241 = vmatmul.f32.gmra.mxu0 %v1240
        %v1242 = vpop.f32.mrf.mxu0
        %v1243 = vadd.f32 %v1086, %v1242
        %v1244 = vand.u32 %v285, 4294901760
        %v1245 = vsub.f32 %v285, %v1244
        %v1246 = vand.u32 %v1245, 4294901760
        %v1247 = vsub.f32 %v1245, %v1246
        %v1248 = vand.u32 %v1247, 4294901760
        %1249 = vmatmul.f32.gmra.mxu0 %v1248
        %v1250 = vpop.f32.mrf.mxu0
        %v1251 = vadd.f32 %v1090, %v1250
        %1252 = vdwg.mxu0
        %v1253 = vand.u32 %v205, 4294901760
        %v1254 = vsub.f32 %v205, %v1253
        %v1255 = vand.u32 %v1254, 4294901760
        %v1256 = vsub.f32 %v1254, %v1255
        %v1257 = vand.u32 %v1256, 4294901760
        %1258 = vmatpush.msra.mxu0 %v1257
        %v1259 = vand.u32 %v204, 4294901760
        %v1260 = vsub.f32 %v204, %v1259
        %v1261 = vand.u32 %v1260, 4294901760
        %v1262 = vsub.f32 %v1260, %v1261
        %v1263 = vand.u32 %v1262, 4294901760
        %1264 = vmatpush.msra.mxu0 %v1263
        %v1265 = vand.u32 %v203, 4294901760
        %v1266 = vsub.f32 %v203, %v1265
        %v1267 = vand.u32 %v1266, 4294901760
        %v1268 = vsub.f32 %v1266, %v1267
        %v1269 = vand.u32 %v1268, 4294901760
        %1270 = vmatpush.msra.mxu0 %v1269
        %v1271 = vand.u32 %v202, 4294901760
        %v1272 = vsub.f32 %v202, %v1271
        %v1273 = vand.u32 %v1272, 4294901760
        %v1274 = vsub.f32 %v1272, %v1273
        %v1275 = vand.u32 %v1274, 4294901760
        %1276 = vmatpush.msra.mxu0 %v1275
        %v1277 = vand.u32 %v201, 4294901760
        %v1278 = vsub.f32 %v201, %v1277
        %v1279 = vand.u32 %v1278, 4294901760
        %v1280 = vsub.f32 %v1278, %v1279
        %v1281 = vand.u32 %v1280, 4294901760
        %1282 = vmatpush.msra.mxu0 %v1281
        %v1283 = vand.u32 %v200, 4294901760
        %v1284 = vsub.f32 %v200, %v1283
        %v1285 = vand.u32 %v1284, 4294901760
        %v1286 = vsub.f32 %v1284, %v1285
        %v1287 = vand.u32 %v1286, 4294901760
        %1288 = vmatpush.msra.mxu0 %v1287
        %v1289 = vand.u32 %v199, 4294901760
        %v1290 = vsub.f32 %v199, %v1289
        %v1291 = vand.u32 %v1290, 4294901760
        %v1292 = vsub.f32 %v1290, %v1291
        %v1293 = vand.u32 %v1292, 4294901760
        %1294 = vmatpush.msra.mxu0 %v1293
        %v1295 = vand.u32 %v198, 4294901760
        %v1296 = vsub.f32 %v198, %v1295
        %v1297 = vand.u32 %v1296, 4294901760
        %v1298 = vsub.f32 %v1296, %v1297
        %v1299 = vand.u32 %v1298, 4294901760
        %1300 = vmatpush.msra.mxu0 %v1299
        %v1301 = vand.u32 %v197, 4294901760
        %v1302 = vsub.f32 %v197, %v1301
        %v1303 = vand.u32 %v1302, 4294901760
        %v1304 = vsub.f32 %v1302, %v1303
        %v1305 = vand.u32 %v1304, 4294901760
        %1306 = vmatpush.msra.mxu0 %v1305
        %v1307 = vand.u32 %v196, 4294901760
        %v1308 = vsub.f32 %v196, %v1307
        %v1309 = vand.u32 %v1308, 4294901760
        %v1310 = vsub.f32 %v1308, %v1309
        %v1311 = vand.u32 %v1310, 4294901760
        %1312 = vmatpush.msra.mxu0 %v1311
        %v1313 = vand.u32 %v195, 4294901760
        %v1314 = vsub.f32 %v195, %v1313
        %v1315 = vand.u32 %v1314, 4294901760
        %v1316 = vsub.f32 %v1314, %v1315
        %v1317 = vand.u32 %v1316, 4294901760
        %1318 = vmatpush.msra.mxu0 %v1317
        %v1319 = vand.u32 %v194, 4294901760
        %v1320 = vsub.f32 %v194, %v1319
        %v1321 = vand.u32 %v1320, 4294901760
        %v1322 = vsub.f32 %v1320, %v1321
        %v1323 = vand.u32 %v1322, 4294901760
        %1324 = vmatpush.msra.mxu0 %v1323
        %v1325 = vand.u32 %v193, 4294901760
        %v1326 = vsub.f32 %v193, %v1325
        %v1327 = vand.u32 %v1326, 4294901760
        %v1328 = vsub.f32 %v1326, %v1327
        %v1329 = vand.u32 %v1328, 4294901760
        %1330 = vmatpush.msra.mxu0 %v1329
        %v1331 = vand.u32 %v192, 4294901760
        %v1332 = vsub.f32 %v192, %v1331
        %v1333 = vand.u32 %v1332, 4294901760
        %v1334 = vsub.f32 %v1332, %v1333
        %v1335 = vand.u32 %v1334, 4294901760
        %1336 = vmatpush.msra.mxu0 %v1335
        %v1337 = vand.u32 %v191, 4294901760
        %v1338 = vsub.f32 %v191, %v1337
        %v1339 = vand.u32 %v1338, 4294901760
        %v1340 = vsub.f32 %v1338, %v1339
        %v1341 = vand.u32 %v1340, 4294901760
        %1342 = vmatpush.msra.mxu0 %v1341
        %v1343 = vand.u32 %v190, 4294901760
        %v1344 = vsub.f32 %v190, %v1343
        %v1345 = vand.u32 %v1344, 4294901760
        %v1346 = vsub.f32 %v1344, %v1345
        %v1347 = vand.u32 %v1346, 4294901760
        %1348 = vmatpush.msra.mxu0 %v1347
        %v1349 = vand.u32 %v270, 4294901760
        %1350 = vmatmul.f32.gmra.mxu0 %v1349
        %v1351 = vpop.f32.mrf.mxu0
        %v1352 = vadd.f32 %v1131, %v1351
        %v1353 = vand.u32 %v271, 4294901760
        %1354 = vmatmul.f32.gmra.mxu0 %v1353
        %v1355 = vpop.f32.mrf.mxu0
        %v1356 = vadd.f32 %v1139, %v1355
        %v1357 = vand.u32 %v272, 4294901760
        %1358 = vmatmul.f32.gmra.mxu0 %v1357
        %v1359 = vpop.f32.mrf.mxu0
        %v1360 = vadd.f32 %v1147, %v1359
        %v1361 = vand.u32 %v273, 4294901760
        %1362 = vmatmul.f32.gmra.mxu0 %v1361
        %v1363 = vpop.f32.mrf.mxu0
        %v1364 = vadd.f32 %v1155, %v1363
        %v1365 = vand.u32 %v274, 4294901760
        %1366 = vmatmul.f32.gmra.mxu0 %v1365
        %v1367 = vpop.f32.mrf.mxu0
        %v1368 = vadd.f32 %v1163, %v1367
        %v1369 = vand.u32 %v275, 4294901760
        %1370 = vmatmul.f32.gmra.mxu0 %v1369
        %v1371 = vpop.f32.mrf.mxu0
        %v1372 = vadd.f32 %v1171, %v1371
        %v1373 = vand.u32 %v276, 4294901760
        %1374 = vmatmul.f32.gmra.mxu0 %v1373
        %v1375 = vpop.f32.mrf.mxu0
        %v1376 = vadd.f32 %v1179, %v1375
        %v1377 = vand.u32 %v277, 4294901760
        %1378 = vmatmul.f32.gmra.mxu0 %v1377
        %v1379 = vpop.f32.mrf.mxu0
        %v1380 = vadd.f32 %v1187, %v1379
        %v1381 = vand.u32 %v278, 4294901760
        %1382 = vmatmul.f32.gmra.mxu0 %v1381
        %v1383 = vpop.f32.mrf.mxu0
        %v1384 = vadd.f32 %v1195, %v1383
        %v1385 = vand.u32 %v279, 4294901760
        %1386 = vmatmul.f32.gmra.mxu0 %v1385
        %v1387 = vpop.f32.mrf.mxu0
        %v1388 = vadd.f32 %v1203, %v1387
        %v1389 = vand.u32 %v280, 4294901760
        %1390 = vmatmul.f32.gmra.mxu0 %v1389
        %v1391 = vpop.f32.mrf.mxu0
        %v1392 = vadd.f32 %v1211, %v1391
        %v1393 = vand.u32 %v281, 4294901760
        %1394 = vmatmul.f32.gmra.mxu0 %v1393
        %v1395 = vpop.f32.mrf.mxu0
        %v1396 = vadd.f32 %v1219, %v1395
        %v1397 = vand.u32 %v282, 4294901760
        %1398 = vmatmul.f32.gmra.mxu0 %v1397
        %v1399 = vpop.f32.mrf.mxu0
        %v1400 = vadd.f32 %v1227, %v1399
        %v1401 = vand.u32 %v283, 4294901760
        %1402 = vmatmul.f32.gmra.mxu0 %v1401
        %v1403 = vpop.f32.mrf.mxu0
        %v1404 = vadd.f32 %v1235, %v1403
        %v1405 = vand.u32 %v284, 4294901760
        %1406 = vmatmul.f32.gmra.mxu0 %v1405
        %v1407 = vpop.f32.mrf.mxu0
        %v1408 = vadd.f32 %v1243, %v1407
        %v1409 = vand.u32 %v285, 4294901760
        %1410 = vmatmul.f32.gmra.mxu0 %v1409
        %v1411 = vpop.f32.mrf.mxu0
        %v1412 = vadd.f32 %v1251, %v1411
        %1413 = vdwg.mxu0
        %v1414 = vand.u32 %v205, 4294901760
        %v1415 = vsub.f32 %v205, %v1414
        %1416 = vmatpush.msra.mxu0 %v1415
        %v1417 = vand.u32 %v204, 4294901760
        %v1418 = vsub.f32 %v204, %v1417
        %1419 = vmatpush.msra.mxu0 %v1418
        %v1420 = vand.u32 %v203, 4294901760
        %v1421 = vsub.f32 %v203, %v1420
        %1422 = vmatpush.msra.mxu0 %v1421
        %v1423 = vand.u32 %v202, 4294901760
        %v1424 = vsub.f32 %v202, %v1423
        %1425 = vmatpush.msra.mxu0 %v1424
        %v1426 = vand.u32 %v201, 4294901760
        %v1427 = vsub.f32 %v201, %v1426
        %1428 = vmatpush.msra.mxu0 %v1427
        %v1429 = vand.u32 %v200, 4294901760
        %v1430 = vsub.f32 %v200, %v1429
        %1431 = vmatpush.msra.mxu0 %v1430
        %v1432 = vand.u32 %v199, 4294901760
        %v1433 = vsub.f32 %v199, %v1432
        %1434 = vmatpush.msra.mxu0 %v1433
        %v1435 = vand.u32 %v198, 4294901760
        %v1436 = vsub.f32 %v198, %v1435
        %1437 = vmatpush.msra.mxu0 %v1436
        %v1438 = vand.u32 %v197, 4294901760
        %v1439 = vsub.f32 %v197, %v1438
        %1440 = vmatpush.msra.mxu0 %v1439
        %v1441 = vand.u32 %v196, 4294901760
        %v1442 = vsub.f32 %v196, %v1441
        %1443 = vmatpush.msra.mxu0 %v1442
        %v1444 = vand.u32 %v195, 4294901760
        %v1445 = vsub.f32 %v195, %v1444
        %1446 = vmatpush.msra.mxu0 %v1445
        %v1447 = vand.u32 %v194, 4294901760
        %v1448 = vsub.f32 %v194, %v1447
        %1449 = vmatpush.msra.mxu0 %v1448
        %v1450 = vand.u32 %v193, 4294901760
        %v1451 = vsub.f32 %v193, %v1450
        %1452 = vmatpush.msra.mxu0 %v1451
        %v1453 = vand.u32 %v192, 4294901760
        %v1454 = vsub.f32 %v192, %v1453
        %1455 = vmatpush.msra.mxu0 %v1454
        %v1456 = vand.u32 %v191, 4294901760
        %v1457 = vsub.f32 %v191, %v1456
        %1458 = vmatpush.msra.mxu0 %v1457
        %v1459 = vand.u32 %v190, 4294901760
        %v1460 = vsub.f32 %v190, %v1459
        %1461 = vmatpush.msra.mxu0 %v1460
        %v1462 = vand.u32 %v270, 4294901760
        %v1463 = vsub.f32 %v270, %v1462
        %1464 = vmatmul.f32.gmra.mxu0 %v1463
        %v1465 = vpop.f32.mrf.mxu0
        %v1466 = vadd.f32 %v1352, %v1465
        %v1467 = vand.u32 %v271, 4294901760
        %v1468 = vsub.f32 %v271, %v1467
        %1469 = vmatmul.f32.gmra.mxu0 %v1468
        %v1470 = vpop.f32.mrf.mxu0
        %v1471 = vadd.f32 %v1356, %v1470
        %v1472 = vand.u32 %v272, 4294901760
        %v1473 = vsub.f32 %v272, %v1472
        %1474 = vmatmul.f32.gmra.mxu0 %v1473
        %v1475 = vpop.f32.mrf.mxu0
        %v1476 = vadd.f32 %v1360, %v1475
        %v1477 = vand.u32 %v273, 4294901760
        %v1478 = vsub.f32 %v273, %v1477
        %1479 = vmatmul.f32.gmra.mxu0 %v1478
        %v1480 = vpop.f32.mrf.mxu0
        %v1481 = vadd.f32 %v1364, %v1480
        %v1482 = vand.u32 %v274, 4294901760
        %v1483 = vsub.f32 %v274, %v1482
        %1484 = vmatmul.f32.gmra.mxu0 %v1483
        %v1485 = vpop.f32.mrf.mxu0
        %v1486 = vadd.f32 %v1368, %v1485
        %v1487 = vand.u32 %v275, 4294901760
        %v1488 = vsub.f32 %v275, %v1487
        %1489 = vmatmul.f32.gmra.mxu0 %v1488
        %v1490 = vpop.f32.mrf.mxu0
        %v1491 = vadd.f32 %v1372, %v1490
        %v1492 = vand.u32 %v276, 4294901760
        %v1493 = vsub.f32 %v276, %v1492
        %1494 = vmatmul.f32.gmra.mxu0 %v1493
        %v1495 = vpop.f32.mrf.mxu0
        %v1496 = vadd.f32 %v1376, %v1495
        %v1497 = vand.u32 %v277, 4294901760
        %v1498 = vsub.f32 %v277, %v1497
        %1499 = vmatmul.f32.gmra.mxu0 %v1498
        %v1500 = vpop.f32.mrf.mxu0
        %v1501 = vadd.f32 %v1380, %v1500
        %v1502 = vand.u32 %v278, 4294901760
        %v1503 = vsub.f32 %v278, %v1502
        %1504 = vmatmul.f32.gmra.mxu0 %v1503
        %v1505 = vpop.f32.mrf.mxu0
        %v1506 = vadd.f32 %v1384, %v1505
        %v1507 = vand.u32 %v279, 4294901760
        %v1508 = vsub.f32 %v279, %v1507
        %1509 = vmatmul.f32.gmra.mxu0 %v1508
        %v1510 = vpop.f32.mrf.mxu0
        %v1511 = vadd.f32 %v1388, %v1510
        %v1512 = vand.u32 %v280, 4294901760
        %v1513 = vsub.f32 %v280, %v1512
        %1514 = vmatmul.f32.gmra.mxu0 %v1513
        %v1515 = vpop.f32.mrf.mxu0
        %v1516 = vadd.f32 %v1392, %v1515
        %v1517 = vand.u32 %v281, 4294901760
        %v1518 = vsub.f32 %v281, %v1517
        %1519 = vmatmul.f32.gmra.mxu0 %v1518
        %v1520 = vpop.f32.mrf.mxu0
        %v1521 = vadd.f32 %v1396, %v1520
        %v1522 = vand.u32 %v282, 4294901760
        %v1523 = vsub.f32 %v282, %v1522
        %1524 = vmatmul.f32.gmra.mxu0 %v1523
        %v1525 = vpop.f32.mrf.mxu0
        %v1526 = vadd.f32 %v1400, %v1525
        %v1527 = vand.u32 %v283, 4294901760
        %v1528 = vsub.f32 %v283, %v1527
        %1529 = vmatmul.f32.gmra.mxu0 %v1528
        %v1530 = vpop.f32.mrf.mxu0
        %v1531 = vadd.f32 %v1404, %v1530
        %v1532 = vand.u32 %v284, 4294901760
        %v1533 = vsub.f32 %v284, %v1532
        %1534 = vmatmul.f32.gmra.mxu0 %v1533
        %v1535 = vpop.f32.mrf.mxu0
        %v1536 = vadd.f32 %v1408, %v1535
        %v1537 = vand.u32 %v285, 4294901760
        %v1538 = vsub.f32 %v285, %v1537
        %1539 = vmatmul.f32.gmra.mxu0 %v1538
        %v1540 = vpop.f32.mrf.mxu0
        %v1541 = vadd.f32 %v1412, %v1540
        %1542 = vdwg.mxu0
        %v1543 = vand.u32 %v205, 4294901760
        %1544 = vmatpush.msra.mxu0 %v1543
        %v1545 = vand.u32 %v204, 4294901760
        %1546 = vmatpush.msra.mxu0 %v1545
        %v1547 = vand.u32 %v203, 4294901760
        %1548 = vmatpush.msra.mxu0 %v1547
        %v1549 = vand.u32 %v202, 4294901760
        %1550 = vmatpush.msra.mxu0 %v1549
        %v1551 = vand.u32 %v201, 4294901760
        %1552 = vmatpush.msra.mxu0 %v1551
        %v1553 = vand.u32 %v200, 4294901760
        %1554 = vmatpush.msra.mxu0 %v1553
        %v1555 = vand.u32 %v199, 4294901760
        %1556 = vmatpush.msra.mxu0 %v1555
        %v1557 = vand.u32 %v198, 4294901760
        %1558 = vmatpush.msra.mxu0 %v1557
        %v1559 = vand.u32 %v197, 4294901760
        %1560 = vmatpush.msra.mxu0 %v1559
        %v1561 = vand.u32 %v196, 4294901760
        %1562 = vmatpush.msra.mxu0 %v1561
        %v1563 = vand.u32 %v195, 4294901760
        %1564 = vmatpush.msra.mxu0 %v1563
        %v1565 = vand.u32 %v194, 4294901760
        %1566 = vmatpush.msra.mxu0 %v1565
        %v1567 = vand.u32 %v193, 4294901760
        %1568 = vmatpush.msra.mxu0 %v1567
        %v1569 = vand.u32 %v192, 4294901760
        %1570 = vmatpush.msra.mxu0 %v1569
        %v1571 = vand.u32 %v191, 4294901760
        %1572 = vmatpush.msra.mxu0 %v1571
        %v1573 = vand.u32 %v190, 4294901760
        %1574 = vmatpush.msra.mxu0 %v1573
        %v1575 = vand.u32 %v270, 4294901760
        %v1576 = vsub.f32 %v270, %v1575
        %v1577 = vand.u32 %v1576, 4294901760
        %1578 = vmatmul.f32.gmra.mxu0 %v1577
        %v1579 = vpop.f32.mrf.mxu0
        %v1580 = vadd.f32 %v1466, %v1579
        %v1581 = vand.u32 %v271, 4294901760
        %v1582 = vsub.f32 %v271, %v1581
        %v1583 = vand.u32 %v1582, 4294901760
        %1584 = vmatmul.f32.gmra.mxu0 %v1583
        %v1585 = vpop.f32.mrf.mxu0
        %v1586 = vadd.f32 %v1471, %v1585
        %v1587 = vand.u32 %v272, 4294901760
        %v1588 = vsub.f32 %v272, %v1587
        %v1589 = vand.u32 %v1588, 4294901760
        %1590 = vmatmul.f32.gmra.mxu0 %v1589
        %v1591 = vpop.f32.mrf.mxu0
        %v1592 = vadd.f32 %v1476, %v1591
        %v1593 = vand.u32 %v273, 4294901760
        %v1594 = vsub.f32 %v273, %v1593
        %v1595 = vand.u32 %v1594, 4294901760
        %1596 = vmatmul.f32.gmra.mxu0 %v1595
        %v1597 = vpop.f32.mrf.mxu0
        %v1598 = vadd.f32 %v1481, %v1597
        %v1599 = vand.u32 %v274, 4294901760
        %v1600 = vsub.f32 %v274, %v1599
        %v1601 = vand.u32 %v1600, 4294901760
        %1602 = vmatmul.f32.gmra.mxu0 %v1601
        %v1603 = vpop.f32.mrf.mxu0
        %v1604 = vadd.f32 %v1486, %v1603
        %v1605 = vand.u32 %v275, 4294901760
        %v1606 = vsub.f32 %v275, %v1605
        %v1607 = vand.u32 %v1606, 4294901760
        %1608 = vmatmul.f32.gmra.mxu0 %v1607
        %v1609 = vpop.f32.mrf.mxu0
        %v1610 = vadd.f32 %v1491, %v1609
        %v1611 = vand.u32 %v276, 4294901760
        %v1612 = vsub.f32 %v276, %v1611
        %v1613 = vand.u32 %v1612, 4294901760
        %1614 = vmatmul.f32.gmra.mxu0 %v1613
        %v1615 = vpop.f32.mrf.mxu0
        %v1616 = vadd.f32 %v1496, %v1615
        %v1617 = vand.u32 %v277, 4294901760
        %v1618 = vsub.f32 %v277, %v1617
        %v1619 = vand.u32 %v1618, 4294901760
        %1620 = vmatmul.f32.gmra.mxu0 %v1619
        %v1621 = vpop.f32.mrf.mxu0
        %v1622 = vadd.f32 %v1501, %v1621
        %v1623 = vand.u32 %v278, 4294901760
        %v1624 = vsub.f32 %v278, %v1623
        %v1625 = vand.u32 %v1624, 4294901760
        %1626 = vmatmul.f32.gmra.mxu0 %v1625
        %v1627 = vpop.f32.mrf.mxu0
        %v1628 = vadd.f32 %v1506, %v1627
        %v1629 = vand.u32 %v279, 4294901760
        %v1630 = vsub.f32 %v279, %v1629
        %v1631 = vand.u32 %v1630, 4294901760
        %1632 = vmatmul.f32.gmra.mxu0 %v1631
        %v1633 = vpop.f32.mrf.mxu0
        %v1634 = vadd.f32 %v1511, %v1633
        %v1635 = vand.u32 %v280, 4294901760
        %v1636 = vsub.f32 %v280, %v1635
        %v1637 = vand.u32 %v1636, 4294901760
        %1638 = vmatmul.f32.gmra.mxu0 %v1637
        %v1639 = vpop.f32.mrf.mxu0
        %v1640 = vadd.f32 %v1516, %v1639
        %v1641 = vand.u32 %v281, 4294901760
        %v1642 = vsub.f32 %v281, %v1641
        %v1643 = vand.u32 %v1642, 4294901760
        %1644 = vmatmul.f32.gmra.mxu0 %v1643
        %v1645 = vpop.f32.mrf.mxu0
        %v1646 = vadd.f32 %v1521, %v1645
        %v1647 = vand.u32 %v282, 4294901760
        %v1648 = vsub.f32 %v282, %v1647
        %v1649 = vand.u32 %v1648, 4294901760
        %1650 = vmatmul.f32.gmra.mxu0 %v1649
        %v1651 = vpop.f32.mrf.mxu0
        %v1652 = vadd.f32 %v1526, %v1651
        %v1653 = vand.u32 %v283, 4294901760
        %v1654 = vsub.f32 %v283, %v1653
        %v1655 = vand.u32 %v1654, 4294901760
        %1656 = vmatmul.f32.gmra.mxu0 %v1655
        %v1657 = vpop.f32.mrf.mxu0
        %v1658 = vadd.f32 %v1531, %v1657
        %v1659 = vand.u32 %v284, 4294901760
        %v1660 = vsub.f32 %v284, %v1659
        %v1661 = vand.u32 %v1660, 4294901760
        %1662 = vmatmul.f32.gmra.mxu0 %v1661
        %v1663 = vpop.f32.mrf.mxu0
        %v1664 = vadd.f32 %v1536, %v1663
        %v1665 = vand.u32 %v285, 4294901760
        %v1666 = vsub.f32 %v285, %v1665
        %v1667 = vand.u32 %v1666, 4294901760
        %1668 = vmatmul.f32.gmra.mxu0 %v1667
        %v1669 = vpop.f32.mrf.mxu0
        %v1670 = vadd.f32 %v1541, %v1669
        %1671 = vdwg.mxu0
        %v1672 = vand.u32 %v205, 4294901760
        %v1673 = vsub.f32 %v205, %v1672
        %v1674 = vand.u32 %v1673, 4294901760
        %1675 = vmatpush.msra.mxu0 %v1674
        %v1676 = vand.u32 %v204, 4294901760
        %v1677 = vsub.f32 %v204, %v1676
        %v1678 = vand.u32 %v1677, 4294901760
        %1679 = vmatpush.msra.mxu0 %v1678
        %v1680 = vand.u32 %v203, 4294901760
        %v1681 = vsub.f32 %v203, %v1680
        %v1682 = vand.u32 %v1681, 4294901760
        %1683 = vmatpush.msra.mxu0 %v1682
        %v1684 = vand.u32 %v202, 4294901760
        %v1685 = vsub.f32 %v202, %v1684
        %v1686 = vand.u32 %v1685, 4294901760
        %1687 = vmatpush.msra.mxu0 %v1686
        %v1688 = vand.u32 %v201, 4294901760
        %v1689 = vsub.f32 %v201, %v1688
        %v1690 = vand.u32 %v1689, 4294901760
        %1691 = vmatpush.msra.mxu0 %v1690
        %v1692 = vand.u32 %v200, 4294901760
        %v1693 = vsub.f32 %v200, %v1692
        %v1694 = vand.u32 %v1693, 4294901760
        %1695 = vmatpush.msra.mxu0 %v1694
        %v1696 = vand.u32 %v199, 4294901760
        %v1697 = vsub.f32 %v199, %v1696
        %v1698 = vand.u32 %v1697, 4294901760
        %1699 = vmatpush.msra.mxu0 %v1698
        %v1700 = vand.u32 %v198, 4294901760
        %v1701 = vsub.f32 %v198, %v1700
        %v1702 = vand.u32 %v1701, 4294901760
        %1703 = vmatpush.msra.mxu0 %v1702
        %v1704 = vand.u32 %v197, 4294901760
        %v1705 = vsub.f32 %v197, %v1704
        %v1706 = vand.u32 %v1705, 4294901760
        %1707 = vmatpush.msra.mxu0 %v1706
        %v1708 = vand.u32 %v196, 4294901760
        %v1709 = vsub.f32 %v196, %v1708
        %v1710 = vand.u32 %v1709, 4294901760
        %1711 = vmatpush.msra.mxu0 %v1710
        %v1712 = vand.u32 %v195, 4294901760
        %v1713 = vsub.f32 %v195, %v1712
        %v1714 = vand.u32 %v1713, 4294901760
        %1715 = vmatpush.msra.mxu0 %v1714
        %v1716 = vand.u32 %v194, 4294901760
        %v1717 = vsub.f32 %v194, %v1716
        %v1718 = vand.u32 %v1717, 4294901760
        %1719 = vmatpush.msra.mxu0 %v1718
        %v1720 = vand.u32 %v193, 4294901760
        %v1721 = vsub.f32 %v193, %v1720
        %v1722 = vand.u32 %v1721, 4294901760
        %1723 = vmatpush.msra.mxu0 %v1722
        %v1724 = vand.u32 %v192, 4294901760
        %v1725 = vsub.f32 %v192, %v1724
        %v1726 = vand.u32 %v1725, 4294901760
        %1727 = vmatpush.msra.mxu0 %v1726
        %v1728 = vand.u32 %v191, 4294901760
        %v1729 = vsub.f32 %v191, %v1728
        %v1730 = vand.u32 %v1729, 4294901760
        %1731 = vmatpush.msra.mxu0 %v1730
        %v1732 = vand.u32 %v190, 4294901760
        %v1733 = vsub.f32 %v190, %v1732
        %v1734 = vand.u32 %v1733, 4294901760
        %1735 = vmatpush.msra.mxu0 %v1734
        %v1736 = vand.u32 %v270, 4294901760
        %1737 = vmatmul.f32.gmra.mxu0 %v1736
        %v1738 = vpop.f32.mrf.mxu0
        %v1739 = vadd.f32 %v1580, %v1738
        %v1740 = vand.u32 %v271, 4294901760
        %1741 = vmatmul.f32.gmra.mxu0 %v1740
        %v1742 = vpop.f32.mrf.mxu0
        %v1743 = vadd.f32 %v1586, %v1742
        %v1744 = vand.u32 %v272, 4294901760
        %1745 = vmatmul.f32.gmra.mxu0 %v1744
        %v1746 = vpop.f32.mrf.mxu0
        %v1747 = vadd.f32 %v1592, %v1746
        %v1748 = vand.u32 %v273, 4294901760
        %1749 = vmatmul.f32.gmra.mxu0 %v1748
        %v1750 = vpop.f32.mrf.mxu0
        %v1751 = vadd.f32 %v1598, %v1750
        %v1752 = vand.u32 %v274, 4294901760
        %1753 = vmatmul.f32.gmra.mxu0 %v1752
        %v1754 = vpop.f32.mrf.mxu0
        %v1755 = vadd.f32 %v1604, %v1754
        %v1756 = vand.u32 %v275, 4294901760
        %1757 = vmatmul.f32.gmra.mxu0 %v1756
        %v1758 = vpop.f32.mrf.mxu0
        %v1759 = vadd.f32 %v1610, %v1758
        %v1760 = vand.u32 %v276, 4294901760
        %1761 = vmatmul.f32.gmra.mxu0 %v1760
        %v1762 = vpop.f32.mrf.mxu0
        %v1763 = vadd.f32 %v1616, %v1762
        %v1764 = vand.u32 %v277, 4294901760
        %1765 = vmatmul.f32.gmra.mxu0 %v1764
        %v1766 = vpop.f32.mrf.mxu0
        %v1767 = vadd.f32 %v1622, %v1766
        %v1768 = vand.u32 %v278, 4294901760
        %1769 = vmatmul.f32.gmra.mxu0 %v1768
        %v1770 = vpop.f32.mrf.mxu0
        %v1771 = vadd.f32 %v1628, %v1770
        %v1772 = vand.u32 %v279, 4294901760
        %1773 = vmatmul.f32.gmra.mxu0 %v1772
        %v1774 = vpop.f32.mrf.mxu0
        %v1775 = vadd.f32 %v1634, %v1774
        %v1776 = vand.u32 %v280, 4294901760
        %1777 = vmatmul.f32.gmra.mxu0 %v1776
        %v1778 = vpop.f32.mrf.mxu0
        %v1779 = vadd.f32 %v1640, %v1778
        %v1780 = vand.u32 %v281, 4294901760
        %1781 = vmatmul.f32.gmra.mxu0 %v1780
        %v1782 = vpop.f32.mrf.mxu0
        %v1783 = vadd.f32 %v1646, %v1782
        %v1784 = vand.u32 %v282, 4294901760
        %1785 = vmatmul.f32.gmra.mxu0 %v1784
        %v1786 = vpop.f32.mrf.mxu0
        %v1787 = vadd.f32 %v1652, %v1786
        %v1788 = vand.u32 %v283, 4294901760
        %1789 = vmatmul.f32.gmra.mxu0 %v1788
        %v1790 = vpop.f32.mrf.mxu0
        %v1791 = vadd.f32 %v1658, %v1790
        %v1792 = vand.u32 %v284, 4294901760
        %1793 = vmatmul.f32.gmra.mxu0 %v1792
        %v1794 = vpop.f32.mrf.mxu0
        %v1795 = vadd.f32 %v1664, %v1794
        %v1796 = vand.u32 %v285, 4294901760
        %1797 = vmatmul.f32.gmra.mxu0 %v1796
        %v1798 = vpop.f32.mrf.mxu0
        %v1799 = vadd.f32 %v1670, %v1798
        %1800 = vdwg.mxu0
        %v1801 = vand.u32 %v205, 4294901760
        %1802 = vmatpush.msra.mxu0 %v1801
        %v1803 = vand.u32 %v204, 4294901760
        %1804 = vmatpush.msra.mxu0 %v1803
        %v1805 = vand.u32 %v203, 4294901760
        %1806 = vmatpush.msra.mxu0 %v1805
        %v1807 = vand.u32 %v202, 4294901760
        %1808 = vmatpush.msra.mxu0 %v1807
        %v1809 = vand.u32 %v201, 4294901760
        %1810 = vmatpush.msra.mxu0 %v1809
        %v1811 = vand.u32 %v200, 4294901760
        %1812 = vmatpush.msra.mxu0 %v1811
        %v1813 = vand.u32 %v199, 4294901760
        %1814 = vmatpush.msra.mxu0 %v1813
        %v1815 = vand.u32 %v198, 4294901760
        %1816 = vmatpush.msra.mxu0 %v1815
        %v1817 = vand.u32 %v197, 4294901760
        %1818 = vmatpush.msra.mxu0 %v1817
        %v1819 = vand.u32 %v196, 4294901760
        %1820 = vmatpush.msra.mxu0 %v1819
        %v1821 = vand.u32 %v195, 4294901760
        %1822 = vmatpush.msra.mxu0 %v1821
        %v1823 = vand.u32 %v194, 4294901760
        %1824 = vmatpush.msra.mxu0 %v1823
        %v1825 = vand.u32 %v193, 4294901760
        %1826 = vmatpush.msra.mxu0 %v1825
        %v1827 = vand.u32 %v192, 4294901760
        %1828 = vmatpush.msra.mxu0 %v1827
        %v1829 = vand.u32 %v191, 4294901760
        %1830 = vmatpush.msra.mxu0 %v1829
        %v1831 = vand.u32 %v190, 4294901760
        %1832 = vmatpush.msra.mxu0 %v1831
        %v1833 = vand.u32 %v270, 4294901760
        %1834 = vmatmul.f32.gmra.mxu0 %v1833
        %v1835 = vpop.f32.mrf.mxu0
        %v1836 = vadd.f32 %v1739, %v1835
        %v1837 = vand.u32 %v271, 4294901760
        %1838 = vmatmul.f32.gmra.mxu0 %v1837
        %v1839 = vpop.f32.mrf.mxu0
        %v1840 = vadd.f32 %v1743, %v1839
        %v1841 = vand.u32 %v272, 4294901760
        %1842 = vmatmul.f32.gmra.mxu0 %v1841
        %v1843 = vpop.f32.mrf.mxu0
        %v1844 = vadd.f32 %v1747, %v1843
        %v1845 = vand.u32 %v273, 4294901760
        %1846 = vmatmul.f32.gmra.mxu0 %v1845
        %v1847 = vpop.f32.mrf.mxu0
        %v1848 = vadd.f32 %v1751, %v1847
        %v1849 = vand.u32 %v274, 4294901760
        %1850 = vmatmul.f32.gmra.mxu0 %v1849
        %v1851 = vpop.f32.mrf.mxu0
        %v1852 = vadd.f32 %v1755, %v1851
        %v1853 = vand.u32 %v275, 4294901760
        %1854 = vmatmul.f32.gmra.mxu0 %v1853
        %v1855 = vpop.f32.mrf.mxu0
        %v1856 = vadd.f32 %v1759, %v1855
        %v1857 = vand.u32 %v276, 4294901760
        %1858 = vmatmul.f32.gmra.mxu0 %v1857
        %v1859 = vpop.f32.mrf.mxu0
        %v1860 = vadd.f32 %v1763, %v1859
        %v1861 = vand.u32 %v277, 4294901760
        %1862 = vmatmul.f32.gmra.mxu0 %v1861
        %v1863 = vpop.f32.mrf.mxu0
        %v1864 = vadd.f32 %v1767, %v1863
        %v1865 = vand.u32 %v278, 4294901760
        %1866 = vmatmul.f32.gmra.mxu0 %v1865
        %v1867 = vpop.f32.mrf.mxu0
        %v1868 = vadd.f32 %v1771, %v1867
        %v1869 = vand.u32 %v279, 4294901760
        %1870 = vmatmul.f32.gmra.mxu0 %v1869
        %v1871 = vpop.f32.mrf.mxu0
        %v1872 = vadd.f32 %v1775, %v1871
        %v1873 = vand.u32 %v280, 4294901760
        %1874 = vmatmul.f32.gmra.mxu0 %v1873
        %v1875 = vpop.f32.mrf.mxu0
        %v1876 = vadd.f32 %v1779, %v1875
        %v1877 = vand.u32 %v281, 4294901760
        %1878 = vmatmul.f32.gmra.mxu0 %v1877
        %v1879 = vpop.f32.mrf.mxu0
        %v1880 = vadd.f32 %v1783, %v1879
        %v1881 = vand.u32 %v282, 4294901760
        %1882 = vmatmul.f32.gmra.mxu0 %v1881
        %v1883 = vpop.f32.mrf.mxu0
        %v1884 = vadd.f32 %v1787, %v1883
        %v1885 = vand.u32 %v283, 4294901760
        %1886 = vmatmul.f32.gmra.mxu0 %v1885
        %v1887 = vpop.f32.mrf.mxu0
        %v1888 = vadd.f32 %v1791, %v1887
        %v1889 = vand.u32 %v284, 4294901760
        %1890 = vmatmul.f32.gmra.mxu0 %v1889
        %v1891 = vpop.f32.mrf.mxu0
        %v1892 = vadd.f32 %v1795, %v1891
        %v1893 = vand.u32 %v285, 4294901760
        %1894 = vmatmul.f32.gmra.mxu0 %v1893
        %v1895 = vpop.f32.mrf.mxu0
        %v1896 = vadd.f32 %v1799, %v1895
        %1897 = vdwg.mxu0
        %v1898 = vadd.f32 %v206, %v1836
        %v1899 = vadd.f32 %v207, %v1840
        %v1900 = vadd.f32 %v208, %v1844
        %v1901 = vadd.f32 %v209, %v1848
        %v1902 = vadd.f32 %v210, %v1852
        %v1903 = vadd.f32 %v211, %v1856
        %v1904 = vadd.f32 %v212, %v1860
        %v1905 = vadd.f32 %v213, %v1864
        %v1906 = vadd.f32 %v214, %v1868
        %v1907 = vadd.f32 %v215, %v1872
        %v1908 = vadd.f32 %v216, %v1876
        %v1909 = vadd.f32 %v217, %v1880
        %v1910 = vadd.f32 %v218, %v1884
        %v1911 = vadd.f32 %v219, %v1888
        %v1912 = vadd.f32 %v220, %v1892
        %v1913 = vadd.f32 %v221, %v1896
        %1914 = vst [vmem:[#allocation2] sm:$0xff] %v1898
        %1915 = vst [vmem:[#allocation2 + $0x8] sm:$0xff] %v1899
        %1916 = vst [vmem:[#allocation2 + $0x10] sm:$0xff] %v1900
        %1917 = vst [vmem:[#allocation2 + $0x18] sm:$0xff] %v1901
        %1918 = vst [vmem:[#allocation2 + $0x20] sm:$0xff] %v1902
        %1919 = vst [vmem:[#allocation2 + $0x28] sm:$0xff] %v1903
        %1920 = vst [vmem:[#allocation2 + $0x30] sm:$0xff] %v1904
        %1921 = vst [vmem:[#allocation2 + $0x38] sm:$0xff] %v1905
        %1922 = vst [vmem:[#allocation2 + $0x40] sm:$0xff] %v1906
        %1923 = vst [vmem:[#allocation2 + $0x48] sm:$0xff] %v1907
        %1924 = vst [vmem:[#allocation2 + $0x50] sm:$0xff] %v1908
        %1925 = vst [vmem:[#allocation2 + $0x58] sm:$0xff] %v1909
        %1926 = vst [vmem:[#allocation2 + $0x60] sm:$0xff] %v1910
        %1927 = vst [vmem:[#allocation2 + $0x68] sm:$0xff] %v1911
        %1928 = vst [vmem:[#allocation2 + $0x70] sm:$0xff] %v1912
        %1929 = vst [vmem:[#allocation2 + $0x78] sm:$0xff] %v1913
        // Predicated region
        $region33: #{tpu_custom_call.1} parent=23 // pred_check
          %p1930 = pneg %p154
        $region34: #{tpu_custom_call.1} parent=23 // pred_check_branch
          %1932 = sbr.rel (%p1930) target = $region36
        $region35: #{tpu_custom_call.1} parent=23 // pred_region
          %v1933 = vld [vmem:[#allocation2] sm:$0xff]
          %v1934 = vld [vmem:[#allocation2 + $0x8] sm:$0xff]
          %v1935 = vld [vmem:[#allocation2 + $0x10] sm:$0xff]
          %v1936 = vld [vmem:[#allocation2 + $0x18] sm:$0xff]
          %v1937 = vld [vmem:[#allocation2 + $0x20] sm:$0xff]
          %v1938 = vld [vmem:[#allocation2 + $0x28] sm:$0xff]
          %v1939 = vld [vmem:[#allocation2 + $0x30] sm:$0xff]
          %v1940 = vld [vmem:[#allocation2 + $0x38] sm:$0xff]
          %v1941 = vld [vmem:[#allocation2 + $0x40] sm:$0xff]
          %v1942 = vld [vmem:[#allocation2 + $0x48] sm:$0xff]
          %v1943 = vld [vmem:[#allocation2 + $0x50] sm:$0xff]
          %v1944 = vld [vmem:[#allocation2 + $0x58] sm:$0xff]
          %v1945 = vld [vmem:[#allocation2 + $0x60] sm:$0xff]
          %v1946 = vld [vmem:[#allocation2 + $0x68] sm:$0xff]
          %v1947 = vld [vmem:[#allocation2 + $0x70] sm:$0xff]
          %v1948 = vld [vmem:[#allocation2 + $0x78] sm:$0xff]
          %1949 = vst [vmem:[%s152] sm:$0xff] %v1933
          %1950 = vst [vmem:[%s152 + $0x8] sm:$0xff] %v1934
          %1951 = vst [vmem:[%s152 + $0x10] sm:$0xff] %v1935
          %1952 = vst [vmem:[%s152 + $0x18] sm:$0xff] %v1936
          %1953 = vst [vmem:[%s152 + $0x20] sm:$0xff] %v1937
          %1954 = vst [vmem:[%s152 + $0x28] sm:$0xff] %v1938
          %1955 = vst [vmem:[%s152 + $0x30] sm:$0xff] %v1939
          %1956 = vst [vmem:[%s152 + $0x38] sm:$0xff] %v1940
          %1957 = vst [vmem:[%s152 + $0x40] sm:$0xff] %v1941
          %1958 = vst [vmem:[%s152 + $0x48] sm:$0xff] %v1942
          %1959 = vst [vmem:[%s152 + $0x50] sm:$0xff] %v1943
          %1960 = vst [vmem:[%s152 + $0x58] sm:$0xff] %v1944
          %1961 = vst [vmem:[%s152 + $0x60] sm:$0xff] %v1945
          %1962 = vst [vmem:[%s152 + $0x68] sm:$0xff] %v1946
          %1963 = vst [vmem:[%s152 + $0x70] sm:$0xff] %v1947
          %1964 = vst [vmem:[%s152 + $0x78] sm:$0xff] %v1948
        $region36: #{tpu_custom_call.1} parent=23 // pred_fallthru
          _
        %s1965 = sand.u32 %s66, 1
        %s1966 = scalar_lea.sflag [#allocation5], %s1965
        %s1967 = sand.u32 %s66, 1
        %s1968 = smul.addr %s1967, 128
        %s1969 = scalar_lea.vmem [#allocation6], %s1968
        // Predicated region
        $region37: #{tpu_custom_call.1} parent=23 // pred_check
          %p1970 = pneg %p76
        $region38: #{tpu_custom_call.1} parent=23 // pred_check_branch
          %1972 = sbr.rel (%p1970) target = $region40
        $region39: #{tpu_custom_call.1} parent=23 // pred_region
          %1974 = vsyncadd %s1966, 0
          %s1975 = smul.addr %s22, 16
          %s1976 = smul.addr %s1975, 8
          %s1977 = scalar_lea.hbm %s1, %s1976
          %s1978 = sshll.u32 %s1969, 4
          %s1979 = int_to_ptr.vmem [resolvable:$true] %s1978
          %s1980 = sshll.u32 %s1977, 4
          %s1981 = int_to_ptr.hbm [resolvable:$true] %s1980
          %1986 = dma.vmem_to_hbm [thread:$0]  %s1979, 2048, %s1981, %s1966, 128, 128, 8
        $region40: #{tpu_custom_call.1} parent=23 // pred_fallthru
          _
      $region24: #{tpu_custom_call.1} parent=5 // pred_fallthru
        _
      %p1987 = scmp.le.s32.totalorder 2, %s13
      // Predicated region
      $region41: #{tpu_custom_call.1} parent=5 // pred_check
        %p1988 = pneg %p1987
      $region42: #{tpu_custom_call.1} parent=5 // pred_check_branch
        %1990 = sbr.rel (%p1988) target = $region44
      $region43: #{tpu_custom_call.1} parent=5 // pred_region
        %s1991 = ssub.s32 %s13, 2
        // Predicated region
        $region45: #{tpu_custom_call.1} parent=43 // pred_check
          %p1992 = pneg %p82
        $region46: #{tpu_custom_call.1} parent=43 // pred_check_branch
          %1994 = sbr.rel (%p1992) target = $region48
        $region47: #{tpu_custom_call.1} parent=43 // pred_region
          %s1995 = sand.u32 %s67, 1
          %s1996 = scalar_lea.sflag [#allocation5], %s1995
          %s1997 = sand.u32 %s67, 1
          %s1998 = smul.addr %s1997, 128
          %s1999 = scalar_lea.vmem [#allocation6], %s1998
          %2001 = dma.done %s1996, 2048
        $region48: #{tpu_custom_call.1} parent=43 // pred_fallthru
          _
      $region44: #{tpu_custom_call.1} parent=5 // pred_fallthru
        _
    $region6: #{tpu_custom_call.1} parent=1 // loop_footer
      %s17 = sadd.s32 1, %s13
    $region7: #{tpu_custom_call.1} parent=1 // loop_footer_branch
      %12 = sbr.rel target = $region3
    $region8: #{tpu_custom_call.1} parent=1 // loop_exit
      _
    %2002 = vsyncpa [#allocation4], 1
    %s2003 = scalar_lea.sflag [#allocation4], 1
    %2004 = vsyncpa %s2003, 1
    %2005 = vsyncpa [#allocation5], 1
    %s2006 = scalar_lea.sflag [#allocation5], 1
    %2007 = vsyncpa %s2006, 1

</llo_original>
